<compile_context>
chip_gen: v7x
topology: tpu7x:2x2x1
jax: 0.10.0
libtpu: 0.0.40
codegen_flags: <defaults>
</compile_context>

<pallas_src>
import jax
import jax.numpy as jnp
from jax.experimental import pallas as pl
from jax.experimental.pallas import tpu as pltpu


def _decoder_kernel(x_ref, lens_ref, w_ih_ref, w_hh_ref, b_ref,
                    w_out_ref, b_out_ref,
                    logp_ref, h_out_ref, c_out_ref,
                    hseq_scr):
    # x_ref    : (T*B, E) f32      lens_ref : (B, 1) int32
    # w_ih_ref : (E, 4H)           w_hh_ref : (H, 4H)         b_ref     : (1, 4H)
    # w_out_ref: (H, V)            b_out_ref: (1, V)
    # logp_ref : (T*B, V)          h_out_ref / c_out_ref : (B, H)
    # hseq_scr : (T*B, H) VMEM scratch (masked hidden sequence for the hoisted output matmul)
    B, H = h_out_ref.shape
    TB = x_ref.shape[0]
    T = TB // B

    # ---------------- hoisted, loop-invariant work ----------------
    # ReLU(embedding) + input-side gate contribution for the WHOLE sequence in one MXU matmul;
    # both LSTM biases folded in here (single broadcast).  Kept in registers (no scratch).
    x = jnp.maximum(x_ref[...], 0.0)                                    # (T*B, E)
    pre = (jnp.dot(x, w_ih_ref[...], preferred_element_type=jnp.float32)
           + b_ref[...])                                                # (T*B, 4H) in vregs

    w_hh = w_hh_ref[...]                                                # recurrent weight, read once
    lens = lens_ref[...]                                                # (B, 1) int32, read once
    # Pre-computed packed-sequence validity masks (hoisted broadcasts, boolean selects in the loop).
    masks = [jnp.broadcast_to(lens > t, (B, H)) for t in range(T)]

    # ---------------- recurrence: fully unrolled (T static, small) ----------------
    h = jnp.zeros((B, H), jnp.float32)
    c = jnp.zeros((B, H), jnp.float32)
    for t in range(T):
        gates = (pre[t * B:(t + 1) * B, :]                              # static slice of vreg value
                 + jnp.dot(h, w_hh, preferred_element_type=jnp.float32))    # (B, 4H)
        sig = jax.nn.sigmoid(gates)          # one full-width EUP pass covers i, f, o gates
        tan = jnp.tanh(gates)                # one full-width EUP pass covers the g gate
        i_g = sig[:, 0:H]
        f_g = sig[:, H:2 * H]
        o_g = sig[:, 3 * H:4 * H]
        g_g = tan[:, 2 * H:3 * H]
        c_new = f_g * c + i_g * g_g
        h_new = o_g * jnp.tanh(c_new)

        m = masks[t]                                                    # (B, H) bool
        h = jnp.where(m, h_new, h)                                      # freeze state past length
        c = jnp.where(m, c_new, c)
        hseq_scr[pl.ds(t * B, B), :] = jnp.where(m, h_new, 0.0)         # pad_packed_sequence -> 0

    h_out_ref[...] = h
    c_out_ref[...] = c

    # ---------------- output projection + LogSoftmax, once, after the loop ----------------
    logits = (jnp.dot(hseq_scr[...], w_out_ref[...],
                      preferred_element_type=jnp.float32)
              + b_out_ref[...])                                         # (T*B, V) in vregs

    if B == 1:
        # B == 1: LogSoftmax over the vocab axis (torch dim=1 after squeeze(dim=1)). Single write.
        mx = jnp.max(logits, axis=1, keepdims=True)
        lse = jnp.log(jnp.sum(jnp.exp(logits - mx), axis=1, keepdims=True))
        logp_ref[...] = logits - mx - lse
    else:
        # B > 1: torch applies LogSoftmax(dim=1) to (T, B, V) -> the *batch* axis.
        # Per-timestep block softmax on the register value, written once per block (no logit scratch).
        for t in range(T):
            blk = logits[t * B:(t + 1) * B, :]                          # (B, V) static value slice
            mx = jnp.max(blk, axis=0, keepdims=True)
            lse = jnp.log(jnp.sum(jnp.exp(blk - mx), axis=0, keepdims=True))
            logp_ref[pl.ds(t * B, B), :] = blk - mx - lse


@jax.jit
def decoder_rnn_forward(tokens, input_lens, params):
    """tokens: (T, B) int32, input_lens: (B,) int32 (sorted descending, max == T)."""
    T, B = tokens.shape
    emb_table = params["emb"]                        # (num_embeddings, E)
    W_ih, W_hh = params["W_ih"], params["W_hh"]      # (4H, E), (4H, H)
    b_ih, b_hh = params["b_ih"], params["b_hh"]      # (4H,), (4H,)
    W_out, b_out = params["W_out"], params["b_out"]  # (V, H), (V,)
    E = emb_table.shape[1]
    H = W_hh.shape[1]
    V = W_out.shape[0]

    # TODO(synk): embedding gather stays in XLA glue (dynamic-index lookup); flattened time-major.
    embeds = jnp.take(emb_table, tokens, axis=0).astype(jnp.float32)   # (T, B, E)
    x2d = embeds.reshape(T * B, E)
    lens2d = input_lens.astype(jnp.int32).reshape(B, 1)

    # Pre-transpose weights for lane-friendly matmuls inside the kernel; fold both LSTM biases.
    w_ih_t = jnp.transpose(W_ih)                     # (E, 4H)
    w_hh_t = jnp.transpose(W_hh)                     # (H, 4H)
    b2d = (b_ih + b_hh).reshape(1, 4 * H)
    w_out_t = jnp.transpose(W_out)                   # (H, V)
    b_out2d = b_out.reshape(1, V)

    vmem = pl.BlockSpec(memory_space=pltpu.MemorySpace.VMEM)

    logp_flat, h_n, c_n = pl.pallas_call(
        _decoder_kernel,
        out_shape=(
            jax.ShapeDtypeStruct((T * B, V), jnp.float32),   # flat, lane-contiguous output slab
            jax.ShapeDtypeStruct((B, H), jnp.float32),
            jax.ShapeDtypeStruct((B, H), jnp.float32),
        ),
        in_specs=[vmem] * 7,
        out_specs=(vmem, vmem, vmem),
        scratch_shapes=[
            pltpu.VMEM((T * B, H), jnp.float32),             # masked hidden-state sequence
        ],
    )(x2d, lens2d, w_ih_t, w_hh_t, b2d, w_out_t, b_out2d)

    # nn.LogSoftmax(dim=1): after .squeeze(dim=1) this is the vocab axis when B == 1,
    # otherwise the batch axis of (T, B, V). Reshapes here are free metadata ops.
    logp = logp_flat.reshape(T, V) if B == 1 else logp_flat.reshape(T, B, V)
    return logp, (h_n.reshape(1, B, H), c_n.reshape(1, B, H))


def _reference_forward(tokens, input_lens, params):
    """Pure-JAX reference mirroring the PyTorch forward."""
    T, B = tokens.shape
    W_ih, W_hh = params["W_ih"], params["W_hh"]
    b_ih, b_hh = params["b_ih"], params["b_hh"]
    W_out, b_out = params["W_out"], params["b_out"]
    H = W_hh.shape[1]
    x = jnp.maximum(params["emb"][tokens], 0.0)
    h = jnp.zeros((B, H), jnp.float32)
    c = jnp.zeros((B, H), jnp.float32)
    lens = input_lens.reshape(B, 1).astype(jnp.int32)
    outs = []
    for t in range(T):
        gates = x[t] @ W_ih.T + h @ W_hh.T + b_ih + b_hh
        i_g, f_g, g_g, o_g = jnp.split(gates, 4, axis=1)
        i_g, f_g = jax.nn.sigmoid(i_g), jax.nn.sigmoid(f_g)
        g_g, o_g = jnp.tanh(g_g), jax.nn.sigmoid(o_g)
        c_new = f_g * c + i_g * g_g
        h_new = o_g * jnp.tanh(c_new)
        m = (t < lens).astype(jnp.float32)
        h = m * h_new + (1.0 - m) * h
        c = m * c_new + (1.0 - m) * c
        outs.append(m * h_new)
    out = jnp.stack(outs)                            # (T, B, H)
    logits = out @ W_out.T + b_out                   # (T, B, V)
    if B == 1:
        logits = logits.reshape(T, -1)
    logp = jax.nn.log_softmax(logits, axis=1)
    return logp, (h[None], c[None])


def _init_params(key, num_embeddings, embedding_dim, hidden_size):
    ks = jax.random.split(key, 7)
    H, E, V = hidden_size, embedding_dim, num_embeddings
    k = 1.0 / jnp.sqrt(jnp.float32(H))
    u = lambda kk, shape: jax.random.uniform(kk, shape, jnp.float32, -k, k)
    return {
        "emb":   jax.random.normal(ks[0], (V, E), jnp.float32),   # nn.Embedding default N(0,1)
        "W_ih":  u(ks[1], (4 * H, E)),
        "W_hh":  u(ks[2], (4 * H, H)),
        "b_ih":  u(ks[3], (4 * H,)),
        "b_hh":  u(ks[4], (4 * H,)),
        "W_out": u(ks[5], (V, H)),
        "b_out": u(ks[6], (V,)),
    }


if __name__ == "__main__":
    # embedding_mode='random': num_embeddings=16, embedding_dim=32, hidden_size=32
    T, B = 8, 2
    NUM_EMB, E, H = 16, 32, 32

    key = jax.random.PRNGKey(0)
    k_tok, k_par = jax.random.split(key)
    params = _init_params(k_par, NUM_EMB, E, H)

    tokens = jax.random.randint(k_tok, (T, B), 0, NUM_EMB, dtype=jnp.int32)   # (T, B), seq-first
    input_lens = jnp.array([8, 5], dtype=jnp.int32)  # sorted descending, max == T (packseq contract)

    logp, (h_n, c_n) = decoder_rnn_forward(tokens, input_lens, params)
    jax.block_until_ready((logp, h_n, c_n))

    ref_logp, (ref_h, ref_c) = _reference_forward(tokens, input_lens, params)
    assert logp.shape == ref_logp.shape == (T, B, NUM_EMB)
    assert h_n.shape == c_n.shape == (1, B, H)
    assert jnp.allclose(logp, ref_logp, atol=2e-3, rtol=2e-3)
    assert jnp.allclose(h_n, ref_h, atol=2e-3, rtol=2e-3)
    assert jnp.allclose(c_n, ref_c, atol=2e-3, rtol=2e-3)

    print("KERNEL_OK")
</pallas_src>

<mosaic_0001>
module attributes {stable_mosaic.version = 11 : i64} {
  func.func @_decoder_kernel(%arg0: memref<16x32xf32, #tpu.memory_space<vmem>>, %arg1: memref<2x1xi32, #tpu.memory_space<vmem>>, %arg2: memref<32x128xf32, #tpu.memory_space<vmem>>, %arg3: memref<32x128xf32, #tpu.memory_space<vmem>>, %arg4: memref<1x128xf32, #tpu.memory_space<vmem>>, %arg5: memref<32x16xf32, #tpu.memory_space<vmem>>, %arg6: memref<1x16xf32, #tpu.memory_space<vmem>>, %arg7: memref<16x16xf32, #tpu.memory_space<vmem>>, %arg8: memref<2x32xf32, #tpu.memory_space<vmem>>, %arg9: memref<2x32xf32, #tpu.memory_space<vmem>>, %arg10: memref<16x32xf32, #tpu.memory_space<vmem>>) attributes {dimension_semantics = [], scalar_prefetch = 0 : i64, scratch_operands = 1 : i64, tpu.core_type = #tpu.core_type<tc>} {
    %c0 = arith.constant 0 : index
    %c0_0 = arith.constant 0 : index
    %0 = vector.load %arg0[%c0, %c0_0] : memref<16x32xf32, #tpu.memory_space<vmem>>, vector<16x32xf32>
    %cst = arith.constant 0.000000e+00 : f32
    %1 = vector.broadcast %cst : f32 to vector<16x32xf32>
    %2 = arith.maximumf %0, %1 : vector<16x32xf32>
    %c0_1 = arith.constant 0 : index
    %c0_2 = arith.constant 0 : index
    %3 = vector.load %arg2[%c0_1, %c0_2] : memref<32x128xf32, #tpu.memory_space<vmem>>, vector<32x128xf32>
    %cst_3 = arith.constant dense<0.000000e+00> : vector<16x128xf32>
    %4 = tpu.matmul %2, %3, %cst_3 {dimension_numbers = #tpu.dot_dimension_numbers<[1], [0], [0], [1], [0, 0, 1, 1], [], []>} : vector<16x32xf32>, vector<32x128xf32>, vector<16x128xf32> -> vector<16x128xf32>
    %c0_4 = arith.constant 0 : index
    %c0_5 = arith.constant 0 : index
    %5 = vector.load %arg4[%c0_4, %c0_5] : memref<1x128xf32, #tpu.memory_space<vmem>>, vector<1x128xf32>
    %6 = vector.broadcast %5 : vector<1x128xf32> to vector<16x128xf32>
    %7 = arith.addf %4, %6 : vector<16x128xf32>
    %c0_6 = arith.constant 0 : index
    %c0_7 = arith.constant 0 : index
    %8 = vector.load %arg3[%c0_6, %c0_7] : memref<32x128xf32, #tpu.memory_space<vmem>>, vector<32x128xf32>
    %c0_8 = arith.constant 0 : index
    %c0_9 = arith.constant 0 : index
    %9 = vector.load %arg1[%c0_8, %c0_9] : memref<2x1xi32, #tpu.memory_space<vmem>>, vector<2x1xi32>
    %c0_i32 = arith.constant 0 : i32
    %10 = vector.broadcast %c0_i32 : i32 to vector<2x1xi32>
    %11 = arith.cmpi sgt, %9, %10 : vector<2x1xi32>
    %12 = vector.shape_cast %11 : vector<2x1xi1> to vector<2x1xi1>
    %13 = vector.broadcast %12 : vector<2x1xi1> to vector<2x32xi1>
    %c1_i32 = arith.constant 1 : i32
    %14 = vector.broadcast %c1_i32 : i32 to vector<2x1xi32>
    %15 = arith.cmpi sgt, %9, %14 : vector<2x1xi32>
    %16 = vector.shape_cast %15 : vector<2x1xi1> to vector<2x1xi1>
    %17 = vector.broadcast %16 : vector<2x1xi1> to vector<2x32xi1>
    %c2_i32 = arith.constant 2 : i32
    %18 = vector.broadcast %c2_i32 : i32 to vector<2x1xi32>
    %19 = arith.cmpi sgt, %9, %18 : vector<2x1xi32>
    %20 = vector.shape_cast %19 : vector<2x1xi1> to vector<2x1xi1>
    %21 = vector.broadcast %20 : vector<2x1xi1> to vector<2x32xi1>
    %c3_i32 = arith.constant 3 : i32
    %22 = vector.broadcast %c3_i32 : i32 to vector<2x1xi32>
    %23 = arith.cmpi sgt, %9, %22 : vector<2x1xi32>
    %24 = vector.shape_cast %23 : vector<2x1xi1> to vector<2x1xi1>
    %25 = vector.broadcast %24 : vector<2x1xi1> to vector<2x32xi1>
    %c4_i32 = arith.constant 4 : i32
    %26 = vector.broadcast %c4_i32 : i32 to vector<2x1xi32>
    %27 = arith.cmpi sgt, %9, %26 : vector<2x1xi32>
    %28 = vector.shape_cast %27 : vector<2x1xi1> to vector<2x1xi1>
    %29 = vector.broadcast %28 : vector<2x1xi1> to vector<2x32xi1>
    %c5_i32 = arith.constant 5 : i32
    %30 = vector.broadcast %c5_i32 : i32 to vector<2x1xi32>
    %31 = arith.cmpi sgt, %9, %30 : vector<2x1xi32>
    %32 = vector.shape_cast %31 : vector<2x1xi1> to vector<2x1xi1>
    %33 = vector.broadcast %32 : vector<2x1xi1> to vector<2x32xi1>
    %c6_i32 = arith.constant 6 : i32
    %34 = vector.broadcast %c6_i32 : i32 to vector<2x1xi32>
    %35 = arith.cmpi sgt, %9, %34 : vector<2x1xi32>
    %36 = vector.shape_cast %35 : vector<2x1xi1> to vector<2x1xi1>
    %37 = vector.broadcast %36 : vector<2x1xi1> to vector<2x32xi1>
    %c7_i32 = arith.constant 7 : i32
    %38 = vector.broadcast %c7_i32 : i32 to vector<2x1xi32>
    %39 = arith.cmpi sgt, %9, %38 : vector<2x1xi32>
    %40 = vector.shape_cast %39 : vector<2x1xi1> to vector<2x1xi1>
    %41 = vector.broadcast %40 : vector<2x1xi1> to vector<2x32xi1>
    %cst_10 = arith.constant 0.000000e+00 : f32
    %42 = vector.broadcast %cst_10 : f32 to vector<2x32xf32>
    %cst_11 = arith.constant 0.000000e+00 : f32
    %43 = vector.broadcast %cst_11 : f32 to vector<2x32xf32>
    %44 = vector.extract_strided_slice %7 {offsets = [0, 0], sizes = [2, 128], strides = [1, 1]} : vector<16x128xf32> to vector<2x128xf32>
    %cst_12 = arith.constant dense<0.000000e+00> : vector<2x128xf32>
    %45 = tpu.matmul %42, %8, %cst_12 {dimension_numbers = #tpu.dot_dimension_numbers<[1], [0], [0], [1], [0, 0, 1, 1], [], []>} : vector<2x32xf32>, vector<32x128xf32>, vector<2x128xf32> -> vector<2x128xf32>
    %46 = arith.addf %44, %45 : vector<2x128xf32>
    %47 = arith.negf %46 : vector<2x128xf32>
    %48 = math.exp %47 : vector<2x128xf32>
    %cst_13 = arith.constant 1.000000e+00 : f32
    %49 = vector.broadcast %cst_13 : f32 to vector<2x128xf32>
    %50 = arith.addf %49, %48 : vector<2x128xf32>
    %51 = arith.divf %49, %50 : vector<2x128xf32>
    %52 = math.tanh %46 : vector<2x128xf32>
    %53 = vector.extract_strided_slice %51 {offsets = [0, 0], sizes = [2, 32], strides = [1, 1]} : vector<2x128xf32> to vector<2x32xf32>
    %54 = vector.extract_strided_slice %51 {offsets = [0, 32], sizes = [2, 32], strides = [1, 1]} : vector<2x128xf32> to vector<2x32xf32>
    %55 = vector.extract_strided_slice %51 {offsets = [0, 96], sizes = [2, 32], strides = [1, 1]} : vector<2x128xf32> to vector<2x32xf32>
    %56 = vector.extract_strided_slice %52 {offsets = [0, 64], sizes = [2, 32], strides = [1, 1]} : vector<2x128xf32> to vector<2x32xf32>
    %57 = arith.mulf %54, %43 : vector<2x32xf32>
    %58 = arith.mulf %53, %56 : vector<2x32xf32>
    %59 = arith.addf %57, %58 : vector<2x32xf32>
    %60 = math.tanh %59 : vector<2x32xf32>
    %61 = arith.mulf %55, %60 : vector<2x32xf32>
    %62 = arith.select %13, %61, %42 : vector<2x32xi1>, vector<2x32xf32>
    %63 = arith.select %13, %59, %43 : vector<2x32xi1>, vector<2x32xf32>
    %cst_14 = arith.constant 0.000000e+00 : f32
    %64 = vector.broadcast %cst_14 : f32 to vector<2x32xf32>
    %65 = arith.select %13, %61, %64 : vector<2x32xi1>, vector<2x32xf32>
    %c0_15 = arith.constant 0 : index
    %c0_16 = arith.constant 0 : index
    %66 = vector.load %arg10[%c0_15, %c0_16] : memref<16x32xf32, #tpu.memory_space<vmem>>, vector<2x32xf32>
    tpu.vector_store %arg10[%c0_15, %c0_16], %65 {strides = array<i32>} : memref<16x32xf32, #tpu.memory_space<vmem>>, vector<2x32xf32>,
    %67 = vector.extract_strided_slice %7 {offsets = [2, 0], sizes = [2, 128], strides = [1, 1]} : vector<16x128xf32> to vector<2x128xf32>
    %cst_17 = arith.constant dense<0.000000e+00> : vector<2x128xf32>
    %68 = tpu.matmul %62, %8, %cst_17 {dimension_numbers = #tpu.dot_dimension_numbers<[1], [0], [0], [1], [0, 0, 1, 1], [], []>} : vector<2x32xf32>, vector<32x128xf32>, vector<2x128xf32> -> vector<2x128xf32>
    %69 = arith.addf %67, %68 : vector<2x128xf32>
    %70 = arith.negf %69 : vector<2x128xf32>
    %71 = math.exp %70 : vector<2x128xf32>
    %cst_18 = arith.constant 1.000000e+00 : f32
    %72 = vector.broadcast %cst_18 : f32 to vector<2x128xf32>
    %73 = arith.addf %72, %71 : vector<2x128xf32>
    %74 = arith.divf %72, %73 : vector<2x128xf32>
    %75 = math.tanh %69 : vector<2x128xf32>
    %76 = vector.extract_strided_slice %74 {offsets = [0, 0], sizes = [2, 32], strides = [1, 1]} : vector<2x128xf32> to vector<2x32xf32>
    %77 = vector.extract_strided_slice %74 {offsets = [0, 32], sizes = [2, 32], strides = [1, 1]} : vector<2x128xf32> to vector<2x32xf32>
    %78 = vector.extract_strided_slice %74 {offsets = [0, 96], sizes = [2, 32], strides = [1, 1]} : vector<2x128xf32> to vector<2x32xf32>
    %79 = vector.extract_strided_slice %75 {offsets = [0, 64], sizes = [2, 32], strides = [1, 1]} : vector<2x128xf32> to vector<2x32xf32>
    %80 = arith.mulf %77, %63 : vector<2x32xf32>
    %81 = arith.mulf %76, %79 : vector<2x32xf32>
    %82 = arith.addf %80, %81 : vector<2x32xf32>
    %83 = math.tanh %82 : vector<2x32xf32>
    %84 = arith.mulf %78, %83 : vector<2x32xf32>
    %85 = arith.select %17, %84, %62 : vector<2x32xi1>, vector<2x32xf32>
    %86 = arith.select %17, %82, %63 : vector<2x32xi1>, vector<2x32xf32>
    %cst_19 = arith.constant 0.000000e+00 : f32
    %87 = vector.broadcast %cst_19 : f32 to vector<2x32xf32>
    %88 = arith.select %17, %84, %87 : vector<2x32xi1>, vector<2x32xf32>
    %c2 = arith.constant 2 : index
    %c0_20 = arith.constant 0 : index
    %89 = vector.load %arg10[%c2, %c0_20] : memref<16x32xf32, #tpu.memory_space<vmem>>, vector<2x32xf32>
    tpu.vector_store %arg10[%c2, %c0_20], %88 {strides = array<i32>} : memref<16x32xf32, #tpu.memory_space<vmem>>, vector<2x32xf32>,
    %90 = vector.extract_strided_slice %7 {offsets = [4, 0], sizes = [2, 128], strides = [1, 1]} : vector<16x128xf32> to vector<2x128xf32>
    %cst_21 = arith.constant dense<0.000000e+00> : vector<2x128xf32>
    %91 = tpu.matmul %85, %8, %cst_21 {dimension_numbers = #tpu.dot_dimension_numbers<[1], [0], [0], [1], [0, 0, 1, 1], [], []>} : vector<2x32xf32>, vector<32x128xf32>, vector<2x128xf32> -> vector<2x128xf32>
    %92 = arith.addf %90, %91 : vector<2x128xf32>
    %93 = arith.negf %92 : vector<2x128xf32>
    %94 = math.exp %93 : vector<2x128xf32>
    %cst_22 = arith.constant 1.000000e+00 : f32
    %95 = vector.broadcast %cst_22 : f32 to vector<2x128xf32>
    %96 = arith.addf %95, %94 : vector<2x128xf32>
    %97 = arith.divf %95, %96 : vector<2x128xf32>
    %98 = math.tanh %92 : vector<2x128xf32>
    %99 = vector.extract_strided_slice %97 {offsets = [0, 0], sizes = [2, 32], strides = [1, 1]} : vector<2x128xf32> to vector<2x32xf32>
    %100 = vector.extract_strided_slice %97 {offsets = [0, 32], sizes = [2, 32], strides = [1, 1]} : vector<2x128xf32> to vector<2x32xf32>
    %101 = vector.extract_strided_slice %97 {offsets = [0, 96], sizes = [2, 32], strides = [1, 1]} : vector<2x128xf32> to vector<2x32xf32>
    %102 = vector.extract_strided_slice %98 {offsets = [0, 64], sizes = [2, 32], strides = [1, 1]} : vector<2x128xf32> to vector<2x32xf32>
    %103 = arith.mulf %100, %86 : vector<2x32xf32>
    %104 = arith.mulf %99, %102 : vector<2x32xf32>
    %105 = arith.addf %103, %104 : vector<2x32xf32>
    %106 = math.tanh %105 : vector<2x32xf32>
    %107 = arith.mulf %101, %106 : vector<2x32xf32>
    %108 = arith.select %21, %107, %85 : vector<2x32xi1>, vector<2x32xf32>
    %109 = arith.select %21, %105, %86 : vector<2x32xi1>, vector<2x32xf32>
    %cst_23 = arith.constant 0.000000e+00 : f32
    %110 = vector.broadcast %cst_23 : f32 to vector<2x32xf32>
    %111 = arith.select %21, %107, %110 : vector<2x32xi1>, vector<2x32xf32>
    %c4 = arith.constant 4 : index
    %c0_24 = arith.constant 0 : index
    %112 = vector.load %arg10[%c4, %c0_24] : memref<16x32xf32, #tpu.memory_space<vmem>>, vector<2x32xf32>
    tpu.vector_store %arg10[%c4, %c0_24], %111 {strides = array<i32>} : memref<16x32xf32, #tpu.memory_space<vmem>>, vector<2x32xf32>,
    %113 = vector.extract_strided_slice %7 {offsets = [6, 0], sizes = [2, 128], strides = [1, 1]} : vector<16x128xf32> to vector<2x128xf32>
    %cst_25 = arith.constant dense<0.000000e+00> : vector<2x128xf32>
    %114 = tpu.matmul %108, %8, %cst_25 {dimension_numbers = #tpu.dot_dimension_numbers<[1], [0], [0], [1], [0, 0, 1, 1], [], []>} : vector<2x32xf32>, vector<32x128xf32>, vector<2x128xf32> -> vector<2x128xf32>
    %115 = arith.addf %113, %114 : vector<2x128xf32>
    %116 = arith.negf %115 : vector<2x128xf32>
    %117 = math.exp %116 : vector<2x128xf32>
    %cst_26 = arith.constant 1.000000e+00 : f32
    %118 = vector.broadcast %cst_26 : f32 to vector<2x128xf32>
    %119 = arith.addf %118, %117 : vector<2x128xf32>
    %120 = arith.divf %118, %119 : vector<2x128xf32>
    %121 = math.tanh %115 : vector<2x128xf32>
    %122 = vector.extract_strided_slice %120 {offsets = [0, 0], sizes = [2, 32], strides = [1, 1]} : vector<2x128xf32> to vector<2x32xf32>
    %123 = vector.extract_strided_slice %120 {offsets = [0, 32], sizes = [2, 32], strides = [1, 1]} : vector<2x128xf32> to vector<2x32xf32>
    %124 = vector.extract_strided_slice %120 {offsets = [0, 96], sizes = [2, 32], strides = [1, 1]} : vector<2x128xf32> to vector<2x32xf32>
    %125 = vector.extract_strided_slice %121 {offsets = [0, 64], sizes = [2, 32], strides = [1, 1]} : vector<2x128xf32> to vector<2x32xf32>
    %126 = arith.mulf %123, %109 : vector<2x32xf32>
    %127 = arith.mulf %122, %125 : vector<2x32xf32>
    %128 = arith.addf %126, %127 : vector<2x32xf32>
    %129 = math.tanh %128 : vector<2x32xf32>
    %130 = arith.mulf %124, %129 : vector<2x32xf32>
    %131 = arith.select %25, %130, %108 : vector<2x32xi1>, vector<2x32xf32>
    %132 = arith.select %25, %128, %109 : vector<2x32xi1>, vector<2x32xf32>
    %cst_27 = arith.constant 0.000000e+00 : f32
    %133 = vector.broadcast %cst_27 : f32 to vector<2x32xf32>
    %134 = arith.select %25, %130, %133 : vector<2x32xi1>, vector<2x32xf32>
    %c6 = arith.constant 6 : index
    %c0_28 = arith.constant 0 : index
    %135 = vector.load %arg10[%c6, %c0_28] : memref<16x32xf32, #tpu.memory_space<vmem>>, vector<2x32xf32>
    tpu.vector_store %arg10[%c6, %c0_28], %134 {strides = array<i32>} : memref<16x32xf32, #tpu.memory_space<vmem>>, vector<2x32xf32>,
    %136 = vector.extract_strided_slice %7 {offsets = [8, 0], sizes = [2, 128], strides = [1, 1]} : vector<16x128xf32> to vector<2x128xf32>
    %cst_29 = arith.constant dense<0.000000e+00> : vector<2x128xf32>
    %137 = tpu.matmul %131, %8, %cst_29 {dimension_numbers = #tpu.dot_dimension_numbers<[1], [0], [0], [1], [0, 0, 1, 1], [], []>} : vector<2x32xf32>, vector<32x128xf32>, vector<2x128xf32> -> vector<2x128xf32>
    %138 = arith.addf %136, %137 : vector<2x128xf32>
    %139 = arith.negf %138 : vector<2x128xf32>
    %140 = math.exp %139 : vector<2x128xf32>
    %cst_30 = arith.constant 1.000000e+00 : f32
    %141 = vector.broadcast %cst_30 : f32 to vector<2x128xf32>
    %142 = arith.addf %141, %140 : vector<2x128xf32>
    %143 = arith.divf %141, %142 : vector<2x128xf32>
    %144 = math.tanh %138 : vector<2x128xf32>
    %145 = vector.extract_strided_slice %143 {offsets = [0, 0], sizes = [2, 32], strides = [1, 1]} : vector<2x128xf32> to vector<2x32xf32>
    %146 = vector.extract_strided_slice %143 {offsets = [0, 32], sizes = [2, 32], strides = [1, 1]} : vector<2x128xf32> to vector<2x32xf32>
    %147 = vector.extract_strided_slice %143 {offsets = [0, 96], sizes = [2, 32], strides = [1, 1]} : vector<2x128xf32> to vector<2x32xf32>
    %148 = vector.extract_strided_slice %144 {offsets = [0, 64], sizes = [2, 32], strides = [1, 1]} : vector<2x128xf32> to vector<2x32xf32>
    %149 = arith.mulf %146, %132 : vector<2x32xf32>
    %150 = arith.mulf %145, %148 : vector<2x32xf32>
    %151 = arith.addf %149, %150 : vector<2x32xf32>
    %152 = math.tanh %151 : vector<2x32xf32>
    %153 = arith.mulf %147, %152 : vector<2x32xf32>
    %154 = arith.select %29, %153, %131 : vector<2x32xi1>, vector<2x32xf32>
    %155 = arith.select %29, %151, %132 : vector<2x32xi1>, vector<2x32xf32>
    %cst_31 = arith.constant 0.000000e+00 : f32
    %156 = vector.broadcast %cst_31 : f32 to vector<2x32xf32>
    %157 = arith.select %29, %153, %156 : vector<2x32xi1>, vector<2x32xf32>
    %c8 = arith.constant 8 : index
    %c0_32 = arith.constant 0 : index
    %158 = vector.load %arg10[%c8, %c0_32] : memref<16x32xf32, #tpu.memory_space<vmem>>, vector<2x32xf32>
    tpu.vector_store %arg10[%c8, %c0_32], %157 {strides = array<i32>} : memref<16x32xf32, #tpu.memory_space<vmem>>, vector<2x32xf32>,
    %159 = vector.extract_strided_slice %7 {offsets = [10, 0], sizes = [2, 128], strides = [1, 1]} : vector<16x128xf32> to vector<2x128xf32>
    %cst_33 = arith.constant dense<0.000000e+00> : vector<2x128xf32>
    %160 = tpu.matmul %154, %8, %cst_33 {dimension_numbers = #tpu.dot_dimension_numbers<[1], [0], [0], [1], [0, 0, 1, 1], [], []>} : vector<2x32xf32>, vector<32x128xf32>, vector<2x128xf32> -> vector<2x128xf32>
    %161 = arith.addf %159, %160 : vector<2x128xf32>
    %162 = arith.negf %161 : vector<2x128xf32>
    %163 = math.exp %162 : vector<2x128xf32>
    %cst_34 = arith.constant 1.000000e+00 : f32
    %164 = vector.broadcast %cst_34 : f32 to vector<2x128xf32>
    %165 = arith.addf %164, %163 : vector<2x128xf32>
    %166 = arith.divf %164, %165 : vector<2x128xf32>
    %167 = math.tanh %161 : vector<2x128xf32>
    %168 = vector.extract_strided_slice %166 {offsets = [0, 0], sizes = [2, 32], strides = [1, 1]} : vector<2x128xf32> to vector<2x32xf32>
    %169 = vector.extract_strided_slice %166 {offsets = [0, 32], sizes = [2, 32], strides = [1, 1]} : vector<2x128xf32> to vector<2x32xf32>
    %170 = vector.extract_strided_slice %166 {offsets = [0, 96], sizes = [2, 32], strides = [1, 1]} : vector<2x128xf32> to vector<2x32xf32>
    %171 = vector.extract_strided_slice %167 {offsets = [0, 64], sizes = [2, 32], strides = [1, 1]} : vector<2x128xf32> to vector<2x32xf32>
    %172 = arith.mulf %169, %155 : vector<2x32xf32>
    %173 = arith.mulf %168, %171 : vector<2x32xf32>
    %174 = arith.addf %172, %173 : vector<2x32xf32>
    %175 = math.tanh %174 : vector<2x32xf32>
    %176 = arith.mulf %170, %175 : vector<2x32xf32>
    %177 = arith.select %33, %176, %154 : vector<2x32xi1>, vector<2x32xf32>
    %178 = arith.select %33, %174, %155 : vector<2x32xi1>, vector<2x32xf32>
    %cst_35 = arith.constant 0.000000e+00 : f32
    %179 = vector.broadcast %cst_35 : f32 to vector<2x32xf32>
    %180 = arith.select %33, %176, %179 : vector<2x32xi1>, vector<2x32xf32>
    %c10 = arith.constant 10 : index
    %c0_36 = arith.constant 0 : index
    %181 = vector.load %arg10[%c10, %c0_36] : memref<16x32xf32, #tpu.memory_space<vmem>>, vector<2x32xf32>
    tpu.vector_store %arg10[%c10, %c0_36], %180 {strides = array<i32>} : memref<16x32xf32, #tpu.memory_space<vmem>>, vector<2x32xf32>,
    %182 = vector.extract_strided_slice %7 {offsets = [12, 0], sizes = [2, 128], strides = [1, 1]} : vector<16x128xf32> to vector<2x128xf32>
    %cst_37 = arith.constant dense<0.000000e+00> : vector<2x128xf32>
    %183 = tpu.matmul %177, %8, %cst_37 {dimension_numbers = #tpu.dot_dimension_numbers<[1], [0], [0], [1], [0, 0, 1, 1], [], []>} : vector<2x32xf32>, vector<32x128xf32>, vector<2x128xf32> -> vector<2x128xf32>
    %184 = arith.addf %182, %183 : vector<2x128xf32>
    %185 = arith.negf %184 : vector<2x128xf32>
    %186 = math.exp %185 : vector<2x128xf32>
    %cst_38 = arith.constant 1.000000e+00 : f32
    %187 = vector.broadcast %cst_38 : f32 to vector<2x128xf32>
    %188 = arith.addf %187, %186 : vector<2x128xf32>
    %189 = arith.divf %187, %188 : vector<2x128xf32>
    %190 = math.tanh %184 : vector<2x128xf32>
    %191 = vector.extract_strided_slice %189 {offsets = [0, 0], sizes = [2, 32], strides = [1, 1]} : vector<2x128xf32> to vector<2x32xf32>
    %192 = vector.extract_strided_slice %189 {offsets = [0, 32], sizes = [2, 32], strides = [1, 1]} : vector<2x128xf32> to vector<2x32xf32>
    %193 = vector.extract_strided_slice %189 {offsets = [0, 96], sizes = [2, 32], strides = [1, 1]} : vector<2x128xf32> to vector<2x32xf32>
    %194 = vector.extract_strided_slice %190 {offsets = [0, 64], sizes = [2, 32], strides = [1, 1]} : vector<2x128xf32> to vector<2x32xf32>
    %195 = arith.mulf %192, %178 : vector<2x32xf32>
    %196 = arith.mulf %191, %194 : vector<2x32xf32>
    %197 = arith.addf %195, %196 : vector<2x32xf32>
    %198 = math.tanh %197 : vector<2x32xf32>
    %199 = arith.mulf %193, %198 : vector<2x32xf32>
    %200 = arith.select %37, %199, %177 : vector<2x32xi1>, vector<2x32xf32>
    %201 = arith.select %37, %197, %178 : vector<2x32xi1>, vector<2x32xf32>
    %cst_39 = arith.constant 0.000000e+00 : f32
    %202 = vector.broadcast %cst_39 : f32 to vector<2x32xf32>
    %203 = arith.select %37, %199, %202 : vector<2x32xi1>, vector<2x32xf32>
    %c12 = arith.constant 12 : index
    %c0_40 = arith.constant 0 : index
    %204 = vector.load %arg10[%c12, %c0_40] : memref<16x32xf32, #tpu.memory_space<vmem>>, vector<2x32xf32>
    tpu.vector_store %arg10[%c12, %c0_40], %203 {strides = array<i32>} : memref<16x32xf32, #tpu.memory_space<vmem>>, vector<2x32xf32>,
    %205 = vector.extract_strided_slice %7 {offsets = [14, 0], sizes = [2, 128], strides = [1, 1]} : vector<16x128xf32> to vector<2x128xf32>
    %cst_41 = arith.constant dense<0.000000e+00> : vector<2x128xf32>
    %206 = tpu.matmul %200, %8, %cst_41 {dimension_numbers = #tpu.dot_dimension_numbers<[1], [0], [0], [1], [0, 0, 1, 1], [], []>} : vector<2x32xf32>, vector<32x128xf32>, vector<2x128xf32> -> vector<2x128xf32>
    %207 = arith.addf %205, %206 : vector<2x128xf32>
    %208 = arith.negf %207 : vector<2x128xf32>
    %209 = math.exp %208 : vector<2x128xf32>
    %cst_42 = arith.constant 1.000000e+00 : f32
    %210 = vector.broadcast %cst_42 : f32 to vector<2x128xf32>
    %211 = arith.addf %210, %209 : vector<2x128xf32>
    %212 = arith.divf %210, %211 : vector<2x128xf32>
    %213 = math.tanh %207 : vector<2x128xf32>
    %214 = vector.extract_strided_slice %212 {offsets = [0, 0], sizes = [2, 32], strides = [1, 1]} : vector<2x128xf32> to vector<2x32xf32>
    %215 = vector.extract_strided_slice %212 {offsets = [0, 32], sizes = [2, 32], strides = [1, 1]} : vector<2x128xf32> to vector<2x32xf32>
    %216 = vector.extract_strided_slice %212 {offsets = [0, 96], sizes = [2, 32], strides = [1, 1]} : vector<2x128xf32> to vector<2x32xf32>
    %217 = vector.extract_strided_slice %213 {offsets = [0, 64], sizes = [2, 32], strides = [1, 1]} : vector<2x128xf32> to vector<2x32xf32>
    %218 = arith.mulf %215, %201 : vector<2x32xf32>
    %219 = arith.mulf %214, %217 : vector<2x32xf32>
    %220 = arith.addf %218, %219 : vector<2x32xf32>
    %221 = math.tanh %220 : vector<2x32xf32>
    %222 = arith.mulf %216, %221 : vector<2x32xf32>
    %223 = arith.select %41, %222, %200 : vector<2x32xi1>, vector<2x32xf32>
    %224 = arith.select %41, %220, %201 : vector<2x32xi1>, vector<2x32xf32>
    %cst_43 = arith.constant 0.000000e+00 : f32
    %225 = vector.broadcast %cst_43 : f32 to vector<2x32xf32>
    %226 = arith.select %41, %222, %225 : vector<2x32xi1>, vector<2x32xf32>
    %c14 = arith.constant 14 : index
    %c0_44 = arith.constant 0 : index
    %227 = vector.load %arg10[%c14, %c0_44] : memref<16x32xf32, #tpu.memory_space<vmem>>, vector<2x32xf32>
    tpu.vector_store %arg10[%c14, %c0_44], %226 {strides = array<i32>} : memref<16x32xf32, #tpu.memory_space<vmem>>, vector<2x32xf32>,
    %c0_45 = arith.constant 0 : index
    %c0_46 = arith.constant 0 : index
    %228 = vector.load %arg8[%c0_45, %c0_46] : memref<2x32xf32, #tpu.memory_space<vmem>>, vector<2x32xf32>
    tpu.vector_store %arg8[%c0_45, %c0_46], %223 {strides = array<i32>} : memref<2x32xf32, #tpu.memory_space<vmem>>, vector<2x32xf32>,
    %c0_47 = arith.constant 0 : index
    %c0_48 = arith.constant 0 : index
    %229 = vector.load %arg9[%c0_47, %c0_48] : memref<2x32xf32, #tpu.memory_space<vmem>>, vector<2x32xf32>
    tpu.vector_store %arg9[%c0_47, %c0_48], %224 {strides = array<i32>} : memref<2x32xf32, #tpu.memory_space<vmem>>, vector<2x32xf32>,
    %c0_49 = arith.constant 0 : index
    %c0_50 = arith.constant 0 : index
    %230 = vector.load %arg10[%c0_49, %c0_50] : memref<16x32xf32, #tpu.memory_space<vmem>>, vector<16x32xf32>
    %c0_51 = arith.constant 0 : index
    %c0_52 = arith.constant 0 : index
    %231 = vector.load %arg5[%c0_51, %c0_52] : memref<32x16xf32, #tpu.memory_space<vmem>>, vector<32x16xf32>
    %cst_53 = arith.constant dense<0.000000e+00> : vector<16x16xf32>
    %232 = tpu.matmul %230, %231, %cst_53 {dimension_numbers = #tpu.dot_dimension_numbers<[1], [0], [0], [1], [0, 0, 1, 1], [], []>} : vector<16x32xf32>, vector<32x16xf32>, vector<16x16xf32> -> vector<16x16xf32>
    %c0_54 = arith.constant 0 : index
    %c0_55 = arith.constant 0 : index
    %233 = vector.load %arg6[%c0_54, %c0_55] : memref<1x16xf32, #tpu.memory_space<vmem>>, vector<1x16xf32>
    %234 = vector.broadcast %233 : vector<1x16xf32> to vector<16x16xf32>
    %235 = arith.addf %232, %234 : vector<16x16xf32>
    %236 = vector.extract_strided_slice %235 {offsets = [0, 0], sizes = [2, 16], strides = [1, 1]} : vector<16x16xf32> to vector<2x16xf32>
    %cst_56 = arith.constant dense<0xFF800000> : vector<16xf32>
    %237 = vector.multi_reduction <maximumf>, %236, %cst_56 [0] : vector<2x16xf32> to vector<16xf32>
    %238 = vector.shape_cast %237 : vector<16xf32> to vector<1x16xf32>
    %239 = vector.broadcast %238 : vector<1x16xf32> to vector<2x16xf32>
    %240 = arith.subf %236, %239 : vector<2x16xf32>
    %241 = math.exp %240 : vector<2x16xf32>
    %cst_57 = arith.constant dense<0.000000e+00> : vector<16xf32>
    %242 = vector.multi_reduction <add>, %241, %cst_57 [0] : vector<2x16xf32> to vector<16xf32>
    %243 = vector.shape_cast %242 : vector<16xf32> to vector<1x16xf32>
    %244 = math.log %243 : vector<1x16xf32>
    %245 = vector.broadcast %238 : vector<1x16xf32> to vector<2x16xf32>
    %246 = arith.subf %236, %245 : vector<2x16xf32>
    %247 = vector.broadcast %244 : vector<1x16xf32> to vector<2x16xf32>
    %248 = arith.subf %246, %247 : vector<2x16xf32>
    %c0_58 = arith.constant 0 : index
    %c0_59 = arith.constant 0 : index
    %249 = vector.load %arg7[%c0_58, %c0_59] : memref<16x16xf32, #tpu.memory_space<vmem>>, vector<2x16xf32>
    tpu.vector_store %arg7[%c0_58, %c0_59], %248 {strides = array<i32>} : memref<16x16xf32, #tpu.memory_space<vmem>>, vector<2x16xf32>,
    %250 = vector.extract_strided_slice %235 {offsets = [2, 0], sizes = [2, 16], strides = [1, 1]} : vector<16x16xf32> to vector<2x16xf32>
    %cst_60 = arith.constant dense<0xFF800000> : vector<16xf32>
    %251 = vector.multi_reduction <maximumf>, %250, %cst_60 [0] : vector<2x16xf32> to vector<16xf32>
    %252 = vector.shape_cast %251 : vector<16xf32> to vector<1x16xf32>
    %253 = vector.broadcast %252 : vector<1x16xf32> to vector<2x16xf32>
    %254 = arith.subf %250, %253 : vector<2x16xf32>
    %255 = math.exp %254 : vector<2x16xf32>
    %cst_61 = arith.constant dense<0.000000e+00> : vector<16xf32>
    %256 = vector.multi_reduction <add>, %255, %cst_61 [0] : vector<2x16xf32> to vector<16xf32>
    %257 = vector.shape_cast %256 : vector<16xf32> to vector<1x16xf32>
    %258 = math.log %257 : vector<1x16xf32>
    %259 = vector.broadcast %252 : vector<1x16xf32> to vector<2x16xf32>
    %260 = arith.subf %250, %259 : vector<2x16xf32>
    %261 = vector.broadcast %258 : vector<1x16xf32> to vector<2x16xf32>
    %262 = arith.subf %260, %261 : vector<2x16xf32>
    %c2_62 = arith.constant 2 : index
    %c0_63 = arith.constant 0 : index
    %263 = vector.load %arg7[%c2_62, %c0_63] : memref<16x16xf32, #tpu.memory_space<vmem>>, vector<2x16xf32>
    tpu.vector_store %arg7[%c2_62, %c0_63], %262 {strides = array<i32>} : memref<16x16xf32, #tpu.memory_space<vmem>>, vector<2x16xf32>,
    %264 = vector.extract_strided_slice %235 {offsets = [4, 0], sizes = [2, 16], strides = [1, 1]} : vector<16x16xf32> to vector<2x16xf32>
    %cst_64 = arith.constant dense<0xFF800000> : vector<16xf32>
    %265 = vector.multi_reduction <maximumf>, %264, %cst_64 [0] : vector<2x16xf32> to vector<16xf32>
    %266 = vector.shape_cast %265 : vector<16xf32> to vector<1x16xf32>
    %267 = vector.broadcast %266 : vector<1x16xf32> to vector<2x16xf32>
    %268 = arith.subf %264, %267 : vector<2x16xf32>
    %269 = math.exp %268 : vector<2x16xf32>
    %cst_65 = arith.constant dense<0.000000e+00> : vector<16xf32>
    %270 = vector.multi_reduction <add>, %269, %cst_65 [0] : vector<2x16xf32> to vector<16xf32>
    %271 = vector.shape_cast %270 : vector<16xf32> to vector<1x16xf32>
    %272 = math.log %271 : vector<1x16xf32>
    %273 = vector.broadcast %266 : vector<1x16xf32> to vector<2x16xf32>
    %274 = arith.subf %264, %273 : vector<2x16xf32>
    %275 = vector.broadcast %272 : vector<1x16xf32> to vector<2x16xf32>
    %276 = arith.subf %274, %275 : vector<2x16xf32>
    %c4_66 = arith.constant 4 : index
    %c0_67 = arith.constant 0 : index
    %277 = vector.load %arg7[%c4_66, %c0_67] : memref<16x16xf32, #tpu.memory_space<vmem>>, vector<2x16xf32>
    tpu.vector_store %arg7[%c4_66, %c0_67], %276 {strides = array<i32>} : memref<16x16xf32, #tpu.memory_space<vmem>>, vector<2x16xf32>,
    %278 = vector.extract_strided_slice %235 {offsets = [6, 0], sizes = [2, 16], strides = [1, 1]} : vector<16x16xf32> to vector<2x16xf32>
    %cst_68 = arith.constant dense<0xFF800000> : vector<16xf32>
    %279 = vector.multi_reduction <maximumf>, %278, %cst_68 [0] : vector<2x16xf32> to vector<16xf32>
    %280 = vector.shape_cast %279 : vector<16xf32> to vector<1x16xf32>
    %281 = vector.broadcast %280 : vector<1x16xf32> to vector<2x16xf32>
    %282 = arith.subf %278, %281 : vector<2x16xf32>
    %283 = math.exp %282 : vector<2x16xf32>
    %cst_69 = arith.constant dense<0.000000e+00> : vector<16xf32>
    %284 = vector.multi_reduction <add>, %283, %cst_69 [0] : vector<2x16xf32> to vector<16xf32>
    %285 = vector.shape_cast %284 : vector<16xf32> to vector<1x16xf32>
    %286 = math.log %285 : vector<1x16xf32>
    %287 = vector.broadcast %280 : vector<1x16xf32> to vector<2x16xf32>
    %288 = arith.subf %278, %287 : vector<2x16xf32>
    %289 = vector.broadcast %286 : vector<1x16xf32> to vector<2x16xf32>
    %290 = arith.subf %288, %289 : vector<2x16xf32>
    %c6_70 = arith.constant 6 : index
    %c0_71 = arith.constant 0 : index
    %291 = vector.load %arg7[%c6_70, %c0_71] : memref<16x16xf32, #tpu.memory_space<vmem>>, vector<2x16xf32>
    tpu.vector_store %arg7[%c6_70, %c0_71], %290 {strides = array<i32>} : memref<16x16xf32, #tpu.memory_space<vmem>>, vector<2x16xf32>,
    %292 = vector.extract_strided_slice %235 {offsets = [8, 0], sizes = [2, 16], strides = [1, 1]} : vector<16x16xf32> to vector<2x16xf32>
    %cst_72 = arith.constant dense<0xFF800000> : vector<16xf32>
    %293 = vector.multi_reduction <maximumf>, %292, %cst_72 [0] : vector<2x16xf32> to vector<16xf32>
    %294 = vector.shape_cast %293 : vector<16xf32> to vector<1x16xf32>
    %295 = vector.broadcast %294 : vector<1x16xf32> to vector<2x16xf32>
    %296 = arith.subf %292, %295 : vector<2x16xf32>
    %297 = math.exp %296 : vector<2x16xf32>
    %cst_73 = arith.constant dense<0.000000e+00> : vector<16xf32>
    %298 = vector.multi_reduction <add>, %297, %cst_73 [0] : vector<2x16xf32> to vector<16xf32>
    %299 = vector.shape_cast %298 : vector<16xf32> to vector<1x16xf32>
    %300 = math.log %299 : vector<1x16xf32>
    %301 = vector.broadcast %294 : vector<1x16xf32> to vector<2x16xf32>
    %302 = arith.subf %292, %301 : vector<2x16xf32>
    %303 = vector.broadcast %300 : vector<1x16xf32> to vector<2x16xf32>
    %304 = arith.subf %302, %303 : vector<2x16xf32>
    %c8_74 = arith.constant 8 : index
    %c0_75 = arith.constant 0 : index
    %305 = vector.load %arg7[%c8_74, %c0_75] : memref<16x16xf32, #tpu.memory_space<vmem>>, vector<2x16xf32>
    tpu.vector_store %arg7[%c8_74, %c0_75], %304 {strides = array<i32>} : memref<16x16xf32, #tpu.memory_space<vmem>>, vector<2x16xf32>,
    %306 = vector.extract_strided_slice %235 {offsets = [10, 0], sizes = [2, 16], strides = [1, 1]} : vector<16x16xf32> to vector<2x16xf32>
    %cst_76 = arith.constant dense<0xFF800000> : vector<16xf32>
    %307 = vector.multi_reduction <maximumf>, %306, %cst_76 [0] : vector<2x16xf32> to vector<16xf32>
    %308 = vector.shape_cast %307 : vector<16xf32> to vector<1x16xf32>
    %309 = vector.broadcast %308 : vector<1x16xf32> to vector<2x16xf32>
    %310 = arith.subf %306, %309 : vector<2x16xf32>
    %311 = math.exp %310 : vector<2x16xf32>
    %cst_77 = arith.constant dense<0.000000e+00> : vector<16xf32>
    %312 = vector.multi_reduction <add>, %311, %cst_77 [0] : vector<2x16xf32> to vector<16xf32>
    %313 = vector.shape_cast %312 : vector<16xf32> to vector<1x16xf32>
    %314 = math.log %313 : vector<1x16xf32>
    %315 = vector.broadcast %308 : vector<1x16xf32> to vector<2x16xf32>
    %316 = arith.subf %306, %315 : vector<2x16xf32>
    %317 = vector.broadcast %314 : vector<1x16xf32> to vector<2x16xf32>
    %318 = arith.subf %316, %317 : vector<2x16xf32>
    %c10_78 = arith.constant 10 : index
    %c0_79 = arith.constant 0 : index
    %319 = vector.load %arg7[%c10_78, %c0_79] : memref<16x16xf32, #tpu.memory_space<vmem>>, vector<2x16xf32>
    tpu.vector_store %arg7[%c10_78, %c0_79], %318 {strides = array<i32>} : memref<16x16xf32, #tpu.memory_space<vmem>>, vector<2x16xf32>,
    %320 = vector.extract_strided_slice %235 {offsets = [12, 0], sizes = [2, 16], strides = [1, 1]} : vector<16x16xf32> to vector<2x16xf32>
    %cst_80 = arith.constant dense<0xFF800000> : vector<16xf32>
    %321 = vector.multi_reduction <maximumf>, %320, %cst_80 [0] : vector<2x16xf32> to vector<16xf32>
    %322 = vector.shape_cast %321 : vector<16xf32> to vector<1x16xf32>
    %323 = vector.broadcast %322 : vector<1x16xf32> to vector<2x16xf32>
    %324 = arith.subf %320, %323 : vector<2x16xf32>
    %325 = math.exp %324 : vector<2x16xf32>
    %cst_81 = arith.constant dense<0.000000e+00> : vector<16xf32>
    %326 = vector.multi_reduction <add>, %325, %cst_81 [0] : vector<2x16xf32> to vector<16xf32>
    %327 = vector.shape_cast %326 : vector<16xf32> to vector<1x16xf32>
    %328 = math.log %327 : vector<1x16xf32>
    %329 = vector.broadcast %322 : vector<1x16xf32> to vector<2x16xf32>
    %330 = arith.subf %320, %329 : vector<2x16xf32>
    %331 = vector.broadcast %328 : vector<1x16xf32> to vector<2x16xf32>
    %332 = arith.subf %330, %331 : vector<2x16xf32>
    %c12_82 = arith.constant 12 : index
    %c0_83 = arith.constant 0 : index
    %333 = vector.load %arg7[%c12_82, %c0_83] : memref<16x16xf32, #tpu.memory_space<vmem>>, vector<2x16xf32>
    tpu.vector_store %arg7[%c12_82, %c0_83], %332 {strides = array<i32>} : memref<16x16xf32, #tpu.memory_space<vmem>>, vector<2x16xf32>,
    %334 = vector.extract_strided_slice %235 {offsets = [14, 0], sizes = [2, 16], strides = [1, 1]} : vector<16x16xf32> to vector<2x16xf32>
    %cst_84 = arith.constant dense<0xFF800000> : vector<16xf32>
    %335 = vector.multi_reduction <maximumf>, %334, %cst_84 [0] : vector<2x16xf32> to vector<16xf32>
    %336 = vector.shape_cast %335 : vector<16xf32> to vector<1x16xf32>
    %337 = vector.broadcast %336 : vector<1x16xf32> to vector<2x16xf32>
    %338 = arith.subf %334, %337 : vector<2x16xf32>
    %339 = math.exp %338 : vector<2x16xf32>
    %cst_85 = arith.constant dense<0.000000e+00> : vector<16xf32>
    %340 = vector.multi_reduction <add>, %339, %cst_85 [0] : vector<2x16xf32> to vector<16xf32>
    %341 = vector.shape_cast %340 : vector<16xf32> to vector<1x16xf32>
    %342 = math.log %341 : vector<1x16xf32>
    %343 = vector.broadcast %336 : vector<1x16xf32> to vector<2x16xf32>
    %344 = arith.subf %334, %343 : vector<2x16xf32>
    %345 = vector.broadcast %342 : vector<1x16xf32> to vector<2x16xf32>
    %346 = arith.subf %344, %345 : vector<2x16xf32>
    %c14_86 = arith.constant 14 : index
    %c0_87 = arith.constant 0 : index
    %347 = vector.load %arg7[%c14_86, %c0_87] : memref<16x16xf32, #tpu.memory_space<vmem>>, vector<2x16xf32>
    tpu.vector_store %arg7[%c14_86, %c0_87], %346 {strides = array<i32>} : memref<16x16xf32, #tpu.memory_space<vmem>>, vector<2x16xf32>,
    return
  }
}

</mosaic_0001>

<llo_original>
// kernel: decoder_rnn_forward.1
$region0: #{decoder_rnn_forward.1}
  #allocation0 [shape = 'u32[]', space=smem, size = 0x4, offset = 0x4, fixed_abs, tag = 'smem constant byte address 0x4 - core index']
  #allocation1 [shape = 'u32[144,128]{1,0:T(1,128)}', space=vmem, size = 0x12000, scoped, tag = 'internal scratch']
  #allocation2 [shape = 'f32[16,32]{1,0:T(8,128)}', space=vmem, size = 0x2000, scoped, tag = 'scratch operand']
  %s0 = inlined_call_operand.vmem [shape: f32[16,32], index: 0, kind: input, shape index: {}]
  %s1 = inlined_call_operand.vmem [shape: s32[2,1], index: 1, kind: input, shape index: {}]
  %s2 = inlined_call_operand.vmem [shape: f32[32,128], index: 2, kind: input, shape index: {}]
  %s3 = inlined_call_operand.vmem [shape: f32[32,128], index: 3, kind: input, shape index: {}]
  %s4 = inlined_call_operand.vmem [shape: f32[1,128], index: 4, kind: input, shape index: {}]
  %s5 = inlined_call_operand.vmem [shape: f32[32,16], index: 5, kind: input, shape index: {}]
  %s6 = inlined_call_operand.vmem [shape: f32[1,16], index: 6, kind: input, shape index: {}]
  %s7 = inlined_call_operand.hbm [shape: f32[16,16], index: 7, kind: output, shape index: {0}]
  %s8 = inlined_call_operand.hbm [shape: f32[2,32], index: 8, kind: output, shape index: {1}]
  %s9 = inlined_call_operand.hbm [shape: f32[2,32], index: 9, kind: output, shape index: {2}]
  %10 = xla_tuple %s7, %s8, %s9
  %s11 = sld [smem:[#allocation0]]
  $region54: #{decoder_rnn_forward.1} parent=0
    _
  %s13 = ssub.s32 1, %s11
  %s14 = scalar_select 0, %s13, %s11
  $region1: #{decoder_rnn_forward.1} parent=0
    #allocation3 [shape = 'u8[8192]{0}', space=vmem, size = 0x2000, scoped, tag = 'output window, operand 0, single buffered']
    #allocation4 [shape = 's32[1]{0}', space=sflag, size = 0x4, scoped, tag = 'scoped memory for decoder_rnn_forward.1']
    #allocation5 [shape = 'u8[1024]{0}', space=vmem, size = 0x400, scoped, tag = 'output window, operand 1, single buffered']
    #allocation6 [shape = 's32[1]{0}', space=sflag, size = 0x4, scoped, tag = 'scoped memory for decoder_rnn_forward.1']
    #allocation7 [shape = 'u8[1024]{0}', space=vmem, size = 0x400, scoped, tag = 'output window, operand 2, single buffered']
    %15 = vsyncpa [#allocation4], 0
    %16 = vsyncpa [#allocation6], 0
    // Predicated region
    $region2: #{decoder_rnn_forward.1} parent=1 // pred_check
      _
    $region3: #{decoder_rnn_forward.1} parent=1 // pred_check_branch
      %18 = sbr.rel (0) target = $region5
    $region4: #{decoder_rnn_forward.1} parent=1 // pred_region
      _
    $region5: #{decoder_rnn_forward.1} parent=1 // pred_fallthru
      _
    // Predicated region
    $region6: #{decoder_rnn_forward.1} parent=1 // pred_check
      _
    $region7: #{decoder_rnn_forward.1} parent=1 // pred_check_branch
      %20 = sbr.rel (0) target = $region9
    $region8: #{decoder_rnn_forward.1} parent=1 // pred_region
      _
    $region9: #{decoder_rnn_forward.1} parent=1 // pred_fallthru
      _
    // Predicated region
    $region10: #{decoder_rnn_forward.1} parent=1 // pred_check
      _
    $region11: #{decoder_rnn_forward.1} parent=1 // pred_check_branch
      %22 = sbr.rel (0) target = $region13
    $region12: #{decoder_rnn_forward.1} parent=1 // pred_region
      _
    $region13: #{decoder_rnn_forward.1} parent=1 // pred_fallthru
      _
    // Predicated region
    $region14: #{decoder_rnn_forward.1} parent=1 // pred_check
      _
    $region15: #{decoder_rnn_forward.1} parent=1 // pred_check_branch
      %24 = sbr.rel (0) target = $region17
    $region16: #{decoder_rnn_forward.1} parent=1 // pred_region
      _
    $region17: #{decoder_rnn_forward.1} parent=1 // pred_fallthru
      _
    // Predicated region
    $region18: #{decoder_rnn_forward.1} parent=1 // pred_check
      _
    $region19: #{decoder_rnn_forward.1} parent=1 // pred_check_branch
      %26 = sbr.rel (0) target = $region21
    $region20: #{decoder_rnn_forward.1} parent=1 // pred_region
      _
    $region21: #{decoder_rnn_forward.1} parent=1 // pred_fallthru
      _
    // Predicated region
    $region22: #{decoder_rnn_forward.1} parent=1 // pred_check
      _
    $region23: #{decoder_rnn_forward.1} parent=1 // pred_check_branch
      %28 = sbr.rel (0) target = $region25
    $region24: #{decoder_rnn_forward.1} parent=1 // pred_region
      _
    $region25: #{decoder_rnn_forward.1} parent=1 // pred_fallthru
      _
    // Predicated region
    $region26: #{decoder_rnn_forward.1} parent=1 // pred_check
      _
    $region27: #{decoder_rnn_forward.1} parent=1 // pred_check_branch
      %30 = sbr.rel (0) target = $region29
    $region28: #{decoder_rnn_forward.1} parent=1 // pred_region
      _
    $region29: #{decoder_rnn_forward.1} parent=1 // pred_fallthru
      _
    %v31 = vld [vmem:[%s0] sm:$0xff]
    %v32 = vld [vmem:[%s0 + $0x8] sm:$0xff]
    %v33 = vmax.f32 %v31, 0.0
    %v34 = vmax.f32 %v32, 0.0
    %v35 = vld [vmem:[%s2] sm:$0xff]
    %v36 = vld [vmem:[%s2 + $0x8] sm:$0xff]
    %v37 = vld [vmem:[%s2 + $0x10] sm:$0xff]
    %v38 = vld [vmem:[%s2 + $0x18] sm:$0xff]
    %v39 = vld [vmem:[%s4] sm:$0x1]
    %v41 = vlaneseq
    %v42 = vshrl.u32 %v41, 7
    %v43 = vsub.s32 0, %v42
    %v44 = vrot.slane %v39, %v43
    %vm46 = vcmask 261120
    %v48 = vsel %vm46, %v33, 0
    %v51 = vsel %vm46, %v34, 0
    %53 = vmatprep.subr.mxu0 0.0
    %54 = vmatpush1.msra.mxu0 %v35
    %55 = vmatprep.subr.mxu0 0.0
    %56 = vmatpush1.msra.mxu0 %v36
    %57 = vmatprep.subr.mxu0 0.0
    %58 = vmatpush1.msra.mxu0 %v37
    %59 = vmatprep.subr.mxu0 0.0
    %60 = vmatpush1.msra.mxu0 %v38
    %61 = vmatprep.subr.mxu0 0.0
    %62 = vmatpush1.msra.mxu0 0.0
    %63 = vmatprep.subr.mxu0 0.0
    %64 = vmatpush1.msra.mxu0 0.0
    %65 = vmatprep.subr.mxu0 0.0
    %66 = vmatpush1.msra.mxu0 0.0
    %67 = vmatprep.subr.mxu0 0.0
    %68 = vmatpush1.msra.mxu0 0.0
    %69 = vmatprep.subr.mxu0 0.0
    %70 = vmatpush1.msra.mxu0 0.0
    %71 = vmatprep.subr.mxu0 0.0
    %72 = vmatpush1.msra.mxu0 0.0
    %73 = vmatprep.subr.mxu0 0.0
    %74 = vmatpush1.msra.mxu0 0.0
    %75 = vmatprep.subr.mxu0 0.0
    %76 = vmatpush1.msra.mxu0 0.0
    %77 = vmatprep.subr.mxu0 0.0
    %78 = vmatpush1.msra.mxu0 0.0
    %79 = vmatprep.subr.mxu0 0.0
    %80 = vmatpush1.msra.mxu0 0.0
    %81 = vmatprep.subr.mxu0 0.0
    %82 = vmatpush1.msra.mxu0 0.0
    %83 = vmatprep.subr.mxu0 0.0
    %84 = vmatpush1.msra.mxu0 0.0
    %85 = vmatprep.subr.mxu0 0.0
    %86 = vmatpush1.msra.mxu0 0.0
    %87 = vmatprep.subr.mxu0 0.0
    %88 = vmatpush1.msra.mxu0 0.0
    %89 = vmatprep.subr.mxu0 0.0
    %90 = vmatpush1.msra.mxu0 0.0
    %91 = vmatprep.subr.mxu0 0.0
    %92 = vmatpush1.msra.mxu0 0.0
    %93 = vmatprep.subr.mxu0 0.0
    %94 = vmatpush1.msra.mxu0 0.0
    %95 = vmatprep.subr.mxu0 0.0
    %96 = vmatpush1.msra.mxu0 0.0
    %97 = vmatprep.subr.mxu0 0.0
    %98 = vmatpush1.msra.mxu0 0.0
    %99 = vmatprep.subr.mxu0 0.0
    %100 = vmatpush1.msra.mxu0 0.0
    %101 = vmatprep.subr.mxu0 0.0
    %102 = vmatpush1.msra.mxu0 0.0
    %103 = vmatprep.subr.mxu0 0.0
    %104 = vmatpush1.msra.mxu0 0.0
    %105 = vmatprep.subr.mxu0 0.0
    %106 = vmatpush1.msra.mxu0 0.0
    %107 = vmatprep.subr.mxu0 0.0
    %108 = vmatpush1.msra.mxu0 0.0
    %109 = vmatprep.subr.mxu0 0.0
    %110 = vmatpush1.msra.mxu0 0.0
    %111 = vmatprep.subr.mxu0 0.0
    %112 = vmatpush1.msra.mxu0 0.0
    %113 = vmatprep.subr.mxu0 0.0
    %114 = vmatpush1.msra.mxu0 0.0
    %115 = vmatprep.subr.mxu0 0.0
    %116 = vmatpush1.msra.mxu0 0.0
    %117 = vmatprep.mubr.f32.mxu0 0.0
    %118 = vmatmul.mubr.f32.gmra.mrb[0].mxu0 %v48
    %v119 = vpop.f32.mrb[0].mxu0
    %v120 = vadd.f32 %v44, %v119
    %v121 = vpop.f32.mrb[0].mxu0
    %122 = vmatprep.mubr.f32.mxu0 0.0
    %123 = vmatmul.mubr.f32.gmra.mrb[0].mxu0 %v51
    %v124 = vpop.f32.mrb[0].mxu0
    %v125 = vadd.f32 %v44, %v124
    %v126 = vpop.f32.mrb[0].mxu0
    %127 = vdwg.mxu0
    %v128 = vld [vmem:[%s3] sm:$0xff]
    %v129 = vld [vmem:[%s3 + $0x8] sm:$0xff]
    %v130 = vld [vmem:[%s3 + $0x10] sm:$0xff]
    %v131 = vld [vmem:[%s3 + $0x18] sm:$0xff]
    %v132 = vld [vmem:[%s1] sm:$0x3]
    %vm133 = vcmp.gt.s32.totalorder %v132, 0
    %v134 = vsel %vm133, 1, 0
    %135 = vset.pattern.permute.xlu0 0
    %136 = vperm.xlu0 %135, %v134
    %v137 = vpop.permute.xlu0 %136
    %vm138 = vcmp.eq.s32.totalorder %v137, 1
    %vm139 = vcmp.gt.s32.totalorder %v132, 1
    %v140 = vsel %vm139, 1, 0
    %141 = vset.pattern.permute.xlu0 0
    %142 = vperm.xlu0 %141, %v140
    %v143 = vpop.permute.xlu0 %142
    %vm144 = vcmp.eq.s32.totalorder %v143, 1
    %vm145 = vcmp.gt.s32.totalorder %v132, 2
    %v146 = vsel %vm145, 1, 0
    %147 = vset.pattern.permute.xlu0 0
    %148 = vperm.xlu0 %147, %v146
    %v149 = vpop.permute.xlu0 %148
    %vm150 = vcmp.eq.s32.totalorder %v149, 1
    %vm151 = vcmp.gt.s32.totalorder %v132, 3
    %v152 = vsel %vm151, 1, 0
    %153 = vset.pattern.permute.xlu0 0
    %154 = vperm.xlu0 %153, %v152
    %v155 = vpop.permute.xlu0 %154
    %vm156 = vcmp.eq.s32.totalorder %v155, 1
    %vm157 = vcmp.gt.s32.totalorder %v132, 4
    %v158 = vsel %vm157, 1, 0
    %159 = vset.pattern.permute.xlu0 0
    %160 = vperm.xlu0 %159, %v158
    %v161 = vpop.permute.xlu0 %160
    %vm162 = vcmp.eq.s32.totalorder %v161, 1
    %vm163 = vcmp.gt.s32.totalorder %v132, 5
    %v164 = vsel %vm163, 1, 0
    %165 = vset.pattern.permute.xlu0 0
    %166 = vperm.xlu0 %165, %v164
    %v167 = vpop.permute.xlu0 %166
    %vm168 = vcmp.eq.s32.totalorder %v167, 1
    %vm169 = vcmp.gt.s32.totalorder %v132, 6
    %v170 = vsel %vm169, 1, 0
    %171 = vset.pattern.permute.xlu0 0
    %172 = vperm.xlu0 %171, %v170
    %v173 = vpop.permute.xlu0 %172
    %vm174 = vcmp.eq.s32.totalorder %v173, 1
    %vm175 = vcmp.gt.s32.totalorder %v132, 7
    %v176 = vsel %vm175, 1, 0
    %177 = vset.pattern.permute.xlu0 0
    %178 = vperm.xlu0 %177, %v176
    %v179 = vpop.permute.xlu0 %178
    %vm180 = vcmp.eq.s32.totalorder %v179, 1
    %v182 = vsel %vm46, 0.0, 0
    %184 = vmatprep.subr.mxu0 0.0
    %185 = vmatpush1.msra.mxu0 %v128
    %186 = vmatprep.subr.mxu0 0.0
    %187 = vmatpush1.msra.mxu0 %v129
    %188 = vmatprep.subr.mxu0 0.0
    %189 = vmatpush1.msra.mxu0 %v130
    %190 = vmatprep.subr.mxu0 0.0
    %191 = vmatpush1.msra.mxu0 %v131
    %192 = vmatprep.subr.mxu0 0.0
    %193 = vmatpush1.msra.mxu0 0.0
    %194 = vmatprep.subr.mxu0 0.0
    %195 = vmatpush1.msra.mxu0 0.0
    %196 = vmatprep.subr.mxu0 0.0
    %197 = vmatpush1.msra.mxu0 0.0
    %198 = vmatprep.subr.mxu0 0.0
    %199 = vmatpush1.msra.mxu0 0.0
    %200 = vmatprep.subr.mxu0 0.0
    %201 = vmatpush1.msra.mxu0 0.0
    %202 = vmatprep.subr.mxu0 0.0
    %203 = vmatpush1.msra.mxu0 0.0
    %204 = vmatprep.subr.mxu0 0.0
    %205 = vmatpush1.msra.mxu0 0.0
    %206 = vmatprep.subr.mxu0 0.0
    %207 = vmatpush1.msra.mxu0 0.0
    %208 = vmatprep.subr.mxu0 0.0
    %209 = vmatpush1.msra.mxu0 0.0
    %210 = vmatprep.subr.mxu0 0.0
    %211 = vmatpush1.msra.mxu0 0.0
    %212 = vmatprep.subr.mxu0 0.0
    %213 = vmatpush1.msra.mxu0 0.0
    %214 = vmatprep.subr.mxu0 0.0
    %215 = vmatpush1.msra.mxu0 0.0
    %216 = vmatprep.subr.mxu0 0.0
    %217 = vmatpush1.msra.mxu0 0.0
    %218 = vmatprep.subr.mxu0 0.0
    %219 = vmatpush1.msra.mxu0 0.0
    %220 = vmatprep.subr.mxu0 0.0
    %221 = vmatpush1.msra.mxu0 0.0
    %222 = vmatprep.subr.mxu0 0.0
    %223 = vmatpush1.msra.mxu0 0.0
    %224 = vmatprep.subr.mxu0 0.0
    %225 = vmatpush1.msra.mxu0 0.0
    %226 = vmatprep.subr.mxu0 0.0
    %227 = vmatpush1.msra.mxu0 0.0
    %228 = vmatprep.subr.mxu0 0.0
    %229 = vmatpush1.msra.mxu0 0.0
    %230 = vmatprep.subr.mxu0 0.0
    %231 = vmatpush1.msra.mxu0 0.0
    %232 = vmatprep.subr.mxu0 0.0
    %233 = vmatpush1.msra.mxu0 0.0
    %234 = vmatprep.subr.mxu0 0.0
    %235 = vmatpush1.msra.mxu0 0.0
    %236 = vmatprep.subr.mxu0 0.0
    %237 = vmatpush1.msra.mxu0 0.0
    %238 = vmatprep.subr.mxu0 0.0
    %239 = vmatpush1.msra.mxu0 0.0
    %240 = vmatprep.subr.mxu0 0.0
    %241 = vmatpush1.msra.mxu0 0.0
    %242 = vmatprep.subr.mxu0 0.0
    %243 = vmatpush1.msra.mxu0 0.0
    %244 = vmatprep.subr.mxu0 0.0
    %245 = vmatpush1.msra.mxu0 0.0
    %246 = vmatprep.subr.mxu0 0.0
    %247 = vmatpush1.msra.mxu0 0.0
    %248 = vmatprep.mubr.f32.mxu0 0.0
    %249 = vmatmul.mubr.f32.gmra.mrb[0].mxu0 %v182
    %v250 = vpop.f32.mrb[0].mxu0
    %v251 = vadd.f32 0.0, %v250
    %v252 = vpop.f32.mrb[0].mxu0
    %253 = vdwg.mxu0
    %v254 = vadd.f32 %v120, %v251
    %v255 = vxor.u32 %v254, 2147483648
    %v256 = vmul.f32 %v255, 1.442695
    %v257 = vpow.pop %v256
    %v258 = vadd.f32 %v257, 1.0
    %v259 = vrcp.pop %v258
    %v260 = vmul.f32 1.0, %v259
    %v261 = vtanh.pop %v254
    %v262 = vmul.f32 %v260, 0.0
    %264 = vrot.lane.b32.xlu0 %v261, 64
    %v265 = vpop.permute.xlu0 %264
    %v267 = vmul.f32 %v260, %v265
    %269 = vrot.lane.b32.xlu0 %v267, 32
    %v270 = vpop.permute.xlu0 %269
    %v272 = vadd.f32 %v262, %v270
    %v273 = vtanh.pop %v272
    %275 = vrot.lane.b32.xlu0 %v273, 64
    %v276 = vpop.permute.xlu0 %275
    %v278 = vmul.f32 %v260, %v276
    %v279 = vsel %vm138, %v278, 0.0
    %v280 = vsel %vm138, %v272, 0.0
    %282 = vrot.lane.b32.xlu0 %v279, 32
    %v283 = vpop.permute.xlu0 %282
    %vm285 = vcmask 254976
    %286 = vst.msk [vmem:[#allocation2] sm:$0x3] %vm285, %v283
    %v287 = vsel %vm46, %v283, 0
    %289 = vmatprep.subr.mxu0 0.0
    %290 = vmatpush1.msra.mxu0 %v128
    %291 = vmatprep.subr.mxu0 0.0
    %292 = vmatpush1.msra.mxu0 %v129
    %293 = vmatprep.subr.mxu0 0.0
    %294 = vmatpush1.msra.mxu0 %v130
    %295 = vmatprep.subr.mxu0 0.0
    %296 = vmatpush1.msra.mxu0 %v131
    %297 = vmatprep.subr.mxu0 0.0
    %298 = vmatpush1.msra.mxu0 0.0
    %299 = vmatprep.subr.mxu0 0.0
    %300 = vmatpush1.msra.mxu0 0.0
    %301 = vmatprep.subr.mxu0 0.0
    %302 = vmatpush1.msra.mxu0 0.0
    %303 = vmatprep.subr.mxu0 0.0
    %304 = vmatpush1.msra.mxu0 0.0
    %305 = vmatprep.subr.mxu0 0.0
    %306 = vmatpush1.msra.mxu0 0.0
    %307 = vmatprep.subr.mxu0 0.0
    %308 = vmatpush1.msra.mxu0 0.0
    %309 = vmatprep.subr.mxu0 0.0
    %310 = vmatpush1.msra.mxu0 0.0
    %311 = vmatprep.subr.mxu0 0.0
    %312 = vmatpush1.msra.mxu0 0.0
    %313 = vmatprep.subr.mxu0 0.0
    %314 = vmatpush1.msra.mxu0 0.0
    %315 = vmatprep.subr.mxu0 0.0
    %316 = vmatpush1.msra.mxu0 0.0
    %317 = vmatprep.subr.mxu0 0.0
    %318 = vmatpush1.msra.mxu0 0.0
    %319 = vmatprep.subr.mxu0 0.0
    %320 = vmatpush1.msra.mxu0 0.0
    %321 = vmatprep.subr.mxu0 0.0
    %322 = vmatpush1.msra.mxu0 0.0
    %323 = vmatprep.subr.mxu0 0.0
    %324 = vmatpush1.msra.mxu0 0.0
    %325 = vmatprep.subr.mxu0 0.0
    %326 = vmatpush1.msra.mxu0 0.0
    %327 = vmatprep.subr.mxu0 0.0
    %328 = vmatpush1.msra.mxu0 0.0
    %329 = vmatprep.subr.mxu0 0.0
    %330 = vmatpush1.msra.mxu0 0.0
    %331 = vmatprep.subr.mxu0 0.0
    %332 = vmatpush1.msra.mxu0 0.0
    %333 = vmatprep.subr.mxu0 0.0
    %334 = vmatpush1.msra.mxu0 0.0
    %335 = vmatprep.subr.mxu0 0.0
    %336 = vmatpush1.msra.mxu0 0.0
    %337 = vmatprep.subr.mxu0 0.0
    %338 = vmatpush1.msra.mxu0 0.0
    %339 = vmatprep.subr.mxu0 0.0
    %340 = vmatpush1.msra.mxu0 0.0
    %341 = vmatprep.subr.mxu0 0.0
    %342 = vmatpush1.msra.mxu0 0.0
    %343 = vmatprep.subr.mxu0 0.0
    %344 = vmatpush1.msra.mxu0 0.0
    %345 = vmatprep.subr.mxu0 0.0
    %346 = vmatpush1.msra.mxu0 0.0
    %347 = vmatprep.subr.mxu0 0.0
    %348 = vmatpush1.msra.mxu0 0.0
    %349 = vmatprep.subr.mxu0 0.0
    %350 = vmatpush1.msra.mxu0 0.0
    %351 = vmatprep.subr.mxu0 0.0
    %352 = vmatpush1.msra.mxu0 0.0
    %353 = vmatprep.mubr.f32.mxu0 0.0
    %354 = vmatmul.mubr.f32.gmra.mrb[0].mxu0 %v287
    %v355 = vpop.f32.mrb[0].mxu0
    %v356 = vadd.f32 0.0, %v355
    %v357 = vpop.f32.mrb[0].mxu0
    %358 = vdwg.mxu0
    %v360 = vrot.slane %v356, 6
    %v362 = vadd.f32 %v120, %v360
    %v363 = vxor.u32 %v362, 2147483648
    %v364 = vmul.f32 %v363, 1.442695
    %v365 = vpow.pop %v364
    %v366 = vadd.f32 %v365, 1.0
    %v367 = vrcp.pop %v366
    %v368 = vmul.f32 1.0, %v367
    %v369 = vtanh.pop %v362
    %v371 = vrot.slane %v280, 6
    %v373 = vmul.f32 %v368, %v371
    %375 = vrot.lane.b32.xlu0 %v369, 64
    %v376 = vpop.permute.xlu0 %375
    %v378 = vmul.f32 %v368, %v376
    %380 = vrot.lane.b32.xlu0 %v378, 32
    %v381 = vpop.permute.xlu0 %380
    %v383 = vadd.f32 %v373, %v381
    %v384 = vtanh.pop %v383
    %386 = vrot.lane.b32.xlu0 %v384, 64
    %v387 = vpop.permute.xlu0 %386
    %v389 = vmul.f32 %v368, %v387
    %v391 = vrot.slane %v389, 2
    %392 = vrot.lane.b32.xlu0 %v391, 32
    %v393 = vpop.permute.xlu0 %392
    %v395 = vsel %vm144, %v393, %v283
    %v397 = vrot.slane %v383, 2
    %398 = vrot.lane.b32.xlu0 %v397, 96
    %v399 = vpop.permute.xlu0 %398
    %401 = vrot.lane.b32.xlu0 %v280, 96
    %v402 = vpop.permute.xlu0 %401
    %v404 = vsel %vm144, %v399, %v402
    %v405 = vsel %vm144, %v393, 0.0
    %406 = vst.msk [vmem:[#allocation2 + $0x2] sm:$0x3] %vm285, %v405
    %v408 = vsel %vm46, %v395, 0
    %410 = vmatprep.subr.mxu0 0.0
    %411 = vmatpush1.msra.mxu0 %v128
    %412 = vmatprep.subr.mxu0 0.0
    %413 = vmatpush1.msra.mxu0 %v129
    %414 = vmatprep.subr.mxu0 0.0
    %415 = vmatpush1.msra.mxu0 %v130
    %416 = vmatprep.subr.mxu0 0.0
    %417 = vmatpush1.msra.mxu0 %v131
    %418 = vmatprep.subr.mxu0 0.0
    %419 = vmatpush1.msra.mxu0 0.0
    %420 = vmatprep.subr.mxu0 0.0
    %421 = vmatpush1.msra.mxu0 0.0
    %422 = vmatprep.subr.mxu0 0.0
    %423 = vmatpush1.msra.mxu0 0.0
    %424 = vmatprep.subr.mxu0 0.0
    %425 = vmatpush1.msra.mxu0 0.0
    %426 = vmatprep.subr.mxu0 0.0
    %427 = vmatpush1.msra.mxu0 0.0
    %428 = vmatprep.subr.mxu0 0.0
    %429 = vmatpush1.msra.mxu0 0.0
    %430 = vmatprep.subr.mxu0 0.0
    %431 = vmatpush1.msra.mxu0 0.0
    %432 = vmatprep.subr.mxu0 0.0
    %433 = vmatpush1.msra.mxu0 0.0
    %434 = vmatprep.subr.mxu0 0.0
    %435 = vmatpush1.msra.mxu0 0.0
    %436 = vmatprep.subr.mxu0 0.0
    %437 = vmatpush1.msra.mxu0 0.0
    %438 = vmatprep.subr.mxu0 0.0
    %439 = vmatpush1.msra.mxu0 0.0
    %440 = vmatprep.subr.mxu0 0.0
    %441 = vmatpush1.msra.mxu0 0.0
    %442 = vmatprep.subr.mxu0 0.0
    %443 = vmatpush1.msra.mxu0 0.0
    %444 = vmatprep.subr.mxu0 0.0
    %445 = vmatpush1.msra.mxu0 0.0
    %446 = vmatprep.subr.mxu0 0.0
    %447 = vmatpush1.msra.mxu0 0.0
    %448 = vmatprep.subr.mxu0 0.0
    %449 = vmatpush1.msra.mxu0 0.0
    %450 = vmatprep.subr.mxu0 0.0
    %451 = vmatpush1.msra.mxu0 0.0
    %452 = vmatprep.subr.mxu0 0.0
    %453 = vmatpush1.msra.mxu0 0.0
    %454 = vmatprep.subr.mxu0 0.0
    %455 = vmatpush1.msra.mxu0 0.0
    %456 = vmatprep.subr.mxu0 0.0
    %457 = vmatpush1.msra.mxu0 0.0
    %458 = vmatprep.subr.mxu0 0.0
    %459 = vmatpush1.msra.mxu0 0.0
    %460 = vmatprep.subr.mxu0 0.0
    %461 = vmatpush1.msra.mxu0 0.0
    %462 = vmatprep.subr.mxu0 0.0
    %463 = vmatpush1.msra.mxu0 0.0
    %464 = vmatprep.subr.mxu0 0.0
    %465 = vmatpush1.msra.mxu0 0.0
    %466 = vmatprep.subr.mxu0 0.0
    %467 = vmatpush1.msra.mxu0 0.0
    %468 = vmatprep.subr.mxu0 0.0
    %469 = vmatpush1.msra.mxu0 0.0
    %470 = vmatprep.subr.mxu0 0.0
    %471 = vmatpush1.msra.mxu0 0.0
    %472 = vmatprep.subr.mxu0 0.0
    %473 = vmatpush1.msra.mxu0 0.0
    %474 = vmatprep.mubr.f32.mxu0 0.0
    %475 = vmatmul.mubr.f32.gmra.mrb[0].mxu0 %v408
    %v476 = vpop.f32.mrb[0].mxu0
    %v477 = vadd.f32 0.0, %v476
    %v478 = vpop.f32.mrb[0].mxu0
    %479 = vdwg.mxu0
    %v481 = vrot.slane %v477, 4
    %v483 = vadd.f32 %v120, %v481
    %v484 = vxor.u32 %v483, 2147483648
    %v485 = vmul.f32 %v484, 1.442695
    %v486 = vpow.pop %v485
    %v487 = vadd.f32 %v486, 1.0
    %v488 = vrcp.pop %v487
    %v489 = vmul.f32 1.0, %v488
    %v490 = vtanh.pop %v483
    %v492 = vrot.slane %v404, 4
    %493 = vrot.lane.b32.xlu0 %v492, 32
    %v494 = vpop.permute.xlu0 %493
    %v496 = vmul.f32 %v489, %v494
    %498 = vrot.lane.b32.xlu0 %v490, 64
    %v499 = vpop.permute.xlu0 %498
    %v501 = vmul.f32 %v489, %v499
    %503 = vrot.lane.b32.xlu0 %v501, 32
    %v504 = vpop.permute.xlu0 %503
    %v506 = vadd.f32 %v496, %v504
    %v507 = vtanh.pop %v506
    %509 = vrot.lane.b32.xlu0 %v507, 64
    %v510 = vpop.permute.xlu0 %509
    %v512 = vmul.f32 %v489, %v510
    %v514 = vrot.slane %v512, 4
    %515 = vrot.lane.b32.xlu0 %v514, 32
    %v516 = vpop.permute.xlu0 %515
    %v518 = vsel %vm150, %v516, %v395
    %v520 = vrot.slane %v506, 4
    %521 = vrot.lane.b32.xlu0 %v520, 96
    %v522 = vpop.permute.xlu0 %521
    %v524 = vsel %vm150, %v522, %v404
    %v525 = vsel %vm150, %v516, 0.0
    %526 = vst.msk [vmem:[#allocation2 + $0x4] sm:$0x3] %vm285, %v525
    %v528 = vsel %vm46, %v518, 0
    %530 = vmatprep.subr.mxu0 0.0
    %531 = vmatpush1.msra.mxu0 %v128
    %532 = vmatprep.subr.mxu0 0.0
    %533 = vmatpush1.msra.mxu0 %v129
    %534 = vmatprep.subr.mxu0 0.0
    %535 = vmatpush1.msra.mxu0 %v130
    %536 = vmatprep.subr.mxu0 0.0
    %537 = vmatpush1.msra.mxu0 %v131
    %538 = vmatprep.subr.mxu0 0.0
    %539 = vmatpush1.msra.mxu0 0.0
    %540 = vmatprep.subr.mxu0 0.0
    %541 = vmatpush1.msra.mxu0 0.0
    %542 = vmatprep.subr.mxu0 0.0
    %543 = vmatpush1.msra.mxu0 0.0
    %544 = vmatprep.subr.mxu0 0.0
    %545 = vmatpush1.msra.mxu0 0.0
    %546 = vmatprep.subr.mxu0 0.0
    %547 = vmatpush1.msra.mxu0 0.0
    %548 = vmatprep.subr.mxu0 0.0
    %549 = vmatpush1.msra.mxu0 0.0
    %550 = vmatprep.subr.mxu0 0.0
    %551 = vmatpush1.msra.mxu0 0.0
    %552 = vmatprep.subr.mxu0 0.0
    %553 = vmatpush1.msra.mxu0 0.0
    %554 = vmatprep.subr.mxu0 0.0
    %555 = vmatpush1.msra.mxu0 0.0
    %556 = vmatprep.subr.mxu0 0.0
    %557 = vmatpush1.msra.mxu0 0.0
    %558 = vmatprep.subr.mxu0 0.0
    %559 = vmatpush1.msra.mxu0 0.0
    %560 = vmatprep.subr.mxu0 0.0
    %561 = vmatpush1.msra.mxu0 0.0
    %562 = vmatprep.subr.mxu0 0.0
    %563 = vmatpush1.msra.mxu0 0.0
    %564 = vmatprep.subr.mxu0 0.0
    %565 = vmatpush1.msra.mxu0 0.0
    %566 = vmatprep.subr.mxu0 0.0
    %567 = vmatpush1.msra.mxu0 0.0
    %568 = vmatprep.subr.mxu0 0.0
    %569 = vmatpush1.msra.mxu0 0.0
    %570 = vmatprep.subr.mxu0 0.0
    %571 = vmatpush1.msra.mxu0 0.0
    %572 = vmatprep.subr.mxu0 0.0
    %573 = vmatpush1.msra.mxu0 0.0
    %574 = vmatprep.subr.mxu0 0.0
    %575 = vmatpush1.msra.mxu0 0.0
    %576 = vmatprep.subr.mxu0 0.0
    %577 = vmatpush1.msra.mxu0 0.0
    %578 = vmatprep.subr.mxu0 0.0
    %579 = vmatpush1.msra.mxu0 0.0
    %580 = vmatprep.subr.mxu0 0.0
    %581 = vmatpush1.msra.mxu0 0.0
    %582 = vmatprep.subr.mxu0 0.0
    %583 = vmatpush1.msra.mxu0 0.0
    %584 = vmatprep.subr.mxu0 0.0
    %585 = vmatpush1.msra.mxu0 0.0
    %586 = vmatprep.subr.mxu0 0.0
    %587 = vmatpush1.msra.mxu0 0.0
    %588 = vmatprep.subr.mxu0 0.0
    %589 = vmatpush1.msra.mxu0 0.0
    %590 = vmatprep.subr.mxu0 0.0
    %591 = vmatpush1.msra.mxu0 0.0
    %592 = vmatprep.subr.mxu0 0.0
    %593 = vmatpush1.msra.mxu0 0.0
    %594 = vmatprep.mubr.f32.mxu0 0.0
    %595 = vmatmul.mubr.f32.gmra.mrb[0].mxu0 %v528
    %v596 = vpop.f32.mrb[0].mxu0
    %v597 = vadd.f32 0.0, %v596
    %v598 = vpop.f32.mrb[0].mxu0
    %599 = vdwg.mxu0
    %v601 = vrot.slane %v597, 2
    %v603 = vadd.f32 %v120, %v601
    %v604 = vxor.u32 %v603, 2147483648
    %v605 = vmul.f32 %v604, 1.442695
    %v606 = vpow.pop %v605
    %v607 = vadd.f32 %v606, 1.0
    %v608 = vrcp.pop %v607
    %v609 = vmul.f32 1.0, %v608
    %v610 = vtanh.pop %v603
    %v612 = vrot.slane %v524, 2
    %613 = vrot.lane.b32.xlu0 %v612, 32
    %v614 = vpop.permute.xlu0 %613
    %v616 = vmul.f32 %v609, %v614
    %618 = vrot.lane.b32.xlu0 %v610, 64
    %v619 = vpop.permute.xlu0 %618
    %v621 = vmul.f32 %v609, %v619
    %623 = vrot.lane.b32.xlu0 %v621, 32
    %v624 = vpop.permute.xlu0 %623
    %v626 = vadd.f32 %v616, %v624
    %v627 = vtanh.pop %v626
    %629 = vrot.lane.b32.xlu0 %v627, 64
    %v630 = vpop.permute.xlu0 %629
    %v632 = vmul.f32 %v609, %v630
    %v634 = vrot.slane %v632, 6
    %635 = vrot.lane.b32.xlu0 %v634, 32
    %v636 = vpop.permute.xlu0 %635
    %v638 = vsel %vm156, %v636, %v518
    %v640 = vrot.slane %v626, 6
    %641 = vrot.lane.b32.xlu0 %v640, 96
    %v642 = vpop.permute.xlu0 %641
    %v644 = vsel %vm156, %v642, %v524
    %v645 = vsel %vm156, %v636, 0.0
    %646 = vst.msk [vmem:[#allocation2 + $0x6] sm:$0x3] %vm285, %v645
    %v648 = vsel %vm46, %v638, 0
    %650 = vmatprep.subr.mxu0 0.0
    %651 = vmatpush1.msra.mxu0 %v128
    %652 = vmatprep.subr.mxu0 0.0
    %653 = vmatpush1.msra.mxu0 %v129
    %654 = vmatprep.subr.mxu0 0.0
    %655 = vmatpush1.msra.mxu0 %v130
    %656 = vmatprep.subr.mxu0 0.0
    %657 = vmatpush1.msra.mxu0 %v131
    %658 = vmatprep.subr.mxu0 0.0
    %659 = vmatpush1.msra.mxu0 0.0
    %660 = vmatprep.subr.mxu0 0.0
    %661 = vmatpush1.msra.mxu0 0.0
    %662 = vmatprep.subr.mxu0 0.0
    %663 = vmatpush1.msra.mxu0 0.0
    %664 = vmatprep.subr.mxu0 0.0
    %665 = vmatpush1.msra.mxu0 0.0
    %666 = vmatprep.subr.mxu0 0.0
    %667 = vmatpush1.msra.mxu0 0.0
    %668 = vmatprep.subr.mxu0 0.0
    %669 = vmatpush1.msra.mxu0 0.0
    %670 = vmatprep.subr.mxu0 0.0
    %671 = vmatpush1.msra.mxu0 0.0
    %672 = vmatprep.subr.mxu0 0.0
    %673 = vmatpush1.msra.mxu0 0.0
    %674 = vmatprep.subr.mxu0 0.0
    %675 = vmatpush1.msra.mxu0 0.0
    %676 = vmatprep.subr.mxu0 0.0
    %677 = vmatpush1.msra.mxu0 0.0
    %678 = vmatprep.subr.mxu0 0.0
    %679 = vmatpush1.msra.mxu0 0.0
    %680 = vmatprep.subr.mxu0 0.0
    %681 = vmatpush1.msra.mxu0 0.0
    %682 = vmatprep.subr.mxu0 0.0
    %683 = vmatpush1.msra.mxu0 0.0
    %684 = vmatprep.subr.mxu0 0.0
    %685 = vmatpush1.msra.mxu0 0.0
    %686 = vmatprep.subr.mxu0 0.0
    %687 = vmatpush1.msra.mxu0 0.0
    %688 = vmatprep.subr.mxu0 0.0
    %689 = vmatpush1.msra.mxu0 0.0
    %690 = vmatprep.subr.mxu0 0.0
    %691 = vmatpush1.msra.mxu0 0.0
    %692 = vmatprep.subr.mxu0 0.0
    %693 = vmatpush1.msra.mxu0 0.0
    %694 = vmatprep.subr.mxu0 0.0
    %695 = vmatpush1.msra.mxu0 0.0
    %696 = vmatprep.subr.mxu0 0.0
    %697 = vmatpush1.msra.mxu0 0.0
    %698 = vmatprep.subr.mxu0 0.0
    %699 = vmatpush1.msra.mxu0 0.0
    %700 = vmatprep.subr.mxu0 0.0
    %701 = vmatpush1.msra.mxu0 0.0
    %702 = vmatprep.subr.mxu0 0.0
    %703 = vmatpush1.msra.mxu0 0.0
    %704 = vmatprep.subr.mxu0 0.0
    %705 = vmatpush1.msra.mxu0 0.0
    %706 = vmatprep.subr.mxu0 0.0
    %707 = vmatpush1.msra.mxu0 0.0
    %708 = vmatprep.subr.mxu0 0.0
    %709 = vmatpush1.msra.mxu0 0.0
    %710 = vmatprep.subr.mxu0 0.0
    %711 = vmatpush1.msra.mxu0 0.0
    %712 = vmatprep.subr.mxu0 0.0
    %713 = vmatpush1.msra.mxu0 0.0
    %714 = vmatprep.mubr.f32.mxu0 0.0
    %715 = vmatmul.mubr.f32.gmra.mrb[0].mxu0 %v648
    %v716 = vpop.f32.mrb[0].mxu0
    %v717 = vadd.f32 0.0, %v716
    %v718 = vpop.f32.mrb[0].mxu0
    %719 = vdwg.mxu0
    %v720 = vadd.f32 %v125, %v717
    %v721 = vxor.u32 %v720, 2147483648
    %v722 = vmul.f32 %v721, 1.442695
    %v723 = vpow.pop %v722
    %v724 = vadd.f32 %v723, 1.0
    %v725 = vrcp.pop %v724
    %v726 = vmul.f32 1.0, %v725
    %v727 = vtanh.pop %v720
    %729 = vrot.lane.b32.xlu0 %v644, 32
    %v730 = vpop.permute.xlu0 %729
    %v732 = vmul.f32 %v726, %v730
    %734 = vrot.lane.b32.xlu0 %v727, 64
    %v735 = vpop.permute.xlu0 %734
    %v737 = vmul.f32 %v726, %v735
    %739 = vrot.lane.b32.xlu0 %v737, 32
    %v740 = vpop.permute.xlu0 %739
    %v742 = vadd.f32 %v732, %v740
    %v743 = vtanh.pop %v742
    %745 = vrot.lane.b32.xlu0 %v743, 64
    %v746 = vpop.permute.xlu0 %745
    %v748 = vmul.f32 %v726, %v746
    %749 = vrot.lane.b32.xlu0 %v638, 96
    %v750 = vpop.permute.xlu0 %749
    %v752 = vsel %vm162, %v748, %v750
    %v753 = vsel %vm162, %v742, %v730
    %v754 = vsel %vm162, %v748, 0.0
    %756 = vrot.lane.b32.xlu0 %v754, 32
    %v757 = vpop.permute.xlu0 %756
    %759 = vst.msk [vmem:[#allocation2 + $0x8] sm:$0x3] %vm285, %v757
    %761 = vrot.lane.b32.xlu0 %v752, 32
    %v762 = vpop.permute.xlu0 %761
    %v763 = vsel %vm46, %v762, 0
    %765 = vmatprep.subr.mxu0 0.0
    %766 = vmatpush1.msra.mxu0 %v128
    %767 = vmatprep.subr.mxu0 0.0
    %768 = vmatpush1.msra.mxu0 %v129
    %769 = vmatprep.subr.mxu0 0.0
    %770 = vmatpush1.msra.mxu0 %v130
    %771 = vmatprep.subr.mxu0 0.0
    %772 = vmatpush1.msra.mxu0 %v131
    %773 = vmatprep.subr.mxu0 0.0
    %774 = vmatpush1.msra.mxu0 0.0
    %775 = vmatprep.subr.mxu0 0.0
    %776 = vmatpush1.msra.mxu0 0.0
    %777 = vmatprep.subr.mxu0 0.0
    %778 = vmatpush1.msra.mxu0 0.0
    %779 = vmatprep.subr.mxu0 0.0
    %780 = vmatpush1.msra.mxu0 0.0
    %781 = vmatprep.subr.mxu0 0.0
    %782 = vmatpush1.msra.mxu0 0.0
    %783 = vmatprep.subr.mxu0 0.0
    %784 = vmatpush1.msra.mxu0 0.0
    %785 = vmatprep.subr.mxu0 0.0
    %786 = vmatpush1.msra.mxu0 0.0
    %787 = vmatprep.subr.mxu0 0.0
    %788 = vmatpush1.msra.mxu0 0.0
    %789 = vmatprep.subr.mxu0 0.0
    %790 = vmatpush1.msra.mxu0 0.0
    %791 = vmatprep.subr.mxu0 0.0
    %792 = vmatpush1.msra.mxu0 0.0
    %793 = vmatprep.subr.mxu0 0.0
    %794 = vmatpush1.msra.mxu0 0.0
    %795 = vmatprep.subr.mxu0 0.0
    %796 = vmatpush1.msra.mxu0 0.0
    %797 = vmatprep.subr.mxu0 0.0
    %798 = vmatpush1.msra.mxu0 0.0
    %799 = vmatprep.subr.mxu0 0.0
    %800 = vmatpush1.msra.mxu0 0.0
    %801 = vmatprep.subr.mxu0 0.0
    %802 = vmatpush1.msra.mxu0 0.0
    %803 = vmatprep.subr.mxu0 0.0
    %804 = vmatpush1.msra.mxu0 0.0
    %805 = vmatprep.subr.mxu0 0.0
    %806 = vmatpush1.msra.mxu0 0.0
    %807 = vmatprep.subr.mxu0 0.0
    %808 = vmatpush1.msra.mxu0 0.0
    %809 = vmatprep.subr.mxu0 0.0
    %810 = vmatpush1.msra.mxu0 0.0
    %811 = vmatprep.subr.mxu0 0.0
    %812 = vmatpush1.msra.mxu0 0.0
    %813 = vmatprep.subr.mxu0 0.0
    %814 = vmatpush1.msra.mxu0 0.0
    %815 = vmatprep.subr.mxu0 0.0
    %816 = vmatpush1.msra.mxu0 0.0
    %817 = vmatprep.subr.mxu0 0.0
    %818 = vmatpush1.msra.mxu0 0.0
    %819 = vmatprep.subr.mxu0 0.0
    %820 = vmatpush1.msra.mxu0 0.0
    %821 = vmatprep.subr.mxu0 0.0
    %822 = vmatpush1.msra.mxu0 0.0
    %823 = vmatprep.subr.mxu0 0.0
    %824 = vmatpush1.msra.mxu0 0.0
    %825 = vmatprep.subr.mxu0 0.0
    %826 = vmatpush1.msra.mxu0 0.0
    %827 = vmatprep.subr.mxu0 0.0
    %828 = vmatpush1.msra.mxu0 0.0
    %829 = vmatprep.mubr.f32.mxu0 0.0
    %830 = vmatmul.mubr.f32.gmra.mrb[0].mxu0 %v763
    %v831 = vpop.f32.mrb[0].mxu0
    %v832 = vadd.f32 0.0, %v831
    %v833 = vpop.f32.mrb[0].mxu0
    %834 = vdwg.mxu0
    %v836 = vrot.slane %v832, 6
    %v838 = vadd.f32 %v125, %v836
    %v839 = vxor.u32 %v838, 2147483648
    %v840 = vmul.f32 %v839, 1.442695
    %v841 = vpow.pop %v840
    %v842 = vadd.f32 %v841, 1.0
    %v843 = vrcp.pop %v842
    %v844 = vmul.f32 1.0, %v843
    %v845 = vtanh.pop %v838
    %v847 = vrot.slane %v753, 6
    %v849 = vmul.f32 %v844, %v847
    %851 = vrot.lane.b32.xlu0 %v845, 64
    %v852 = vpop.permute.xlu0 %851
    %v854 = vmul.f32 %v844, %v852
    %856 = vrot.lane.b32.xlu0 %v854, 32
    %v857 = vpop.permute.xlu0 %856
    %v859 = vadd.f32 %v849, %v857
    %v860 = vtanh.pop %v859
    %862 = vrot.lane.b32.xlu0 %v860, 64
    %v863 = vpop.permute.xlu0 %862
    %v865 = vmul.f32 %v844, %v863
    %v867 = vrot.slane %v865, 2
    %868 = vrot.lane.b32.xlu0 %v867, 32
    %v869 = vpop.permute.xlu0 %868
    %v872 = vsel %vm168, %v869, %v762
    %v874 = vrot.slane %v859, 2
    %875 = vrot.lane.b32.xlu0 %v874, 96
    %v876 = vpop.permute.xlu0 %875
    %878 = vrot.lane.b32.xlu0 %v753, 96
    %v879 = vpop.permute.xlu0 %878
    %v881 = vsel %vm168, %v876, %v879
    %v882 = vsel %vm168, %v869, 0.0
    %883 = vst.msk [vmem:[#allocation2 + $0xa] sm:$0x3] %vm285, %v882
    %v885 = vsel %vm46, %v872, 0
    %887 = vmatprep.subr.mxu0 0.0
    %888 = vmatpush1.msra.mxu0 %v128
    %889 = vmatprep.subr.mxu0 0.0
    %890 = vmatpush1.msra.mxu0 %v129
    %891 = vmatprep.subr.mxu0 0.0
    %892 = vmatpush1.msra.mxu0 %v130
    %893 = vmatprep.subr.mxu0 0.0
    %894 = vmatpush1.msra.mxu0 %v131
    %895 = vmatprep.subr.mxu0 0.0
    %896 = vmatpush1.msra.mxu0 0.0
    %897 = vmatprep.subr.mxu0 0.0
    %898 = vmatpush1.msra.mxu0 0.0
    %899 = vmatprep.subr.mxu0 0.0
    %900 = vmatpush1.msra.mxu0 0.0
    %901 = vmatprep.subr.mxu0 0.0
    %902 = vmatpush1.msra.mxu0 0.0
    %903 = vmatprep.subr.mxu0 0.0
    %904 = vmatpush1.msra.mxu0 0.0
    %905 = vmatprep.subr.mxu0 0.0
    %906 = vmatpush1.msra.mxu0 0.0
    %907 = vmatprep.subr.mxu0 0.0
    %908 = vmatpush1.msra.mxu0 0.0
    %909 = vmatprep.subr.mxu0 0.0
    %910 = vmatpush1.msra.mxu0 0.0
    %911 = vmatprep.subr.mxu0 0.0
    %912 = vmatpush1.msra.mxu0 0.0
    %913 = vmatprep.subr.mxu0 0.0
    %914 = vmatpush1.msra.mxu0 0.0
    %915 = vmatprep.subr.mxu0 0.0
    %916 = vmatpush1.msra.mxu0 0.0
    %917 = vmatprep.subr.mxu0 0.0
    %918 = vmatpush1.msra.mxu0 0.0
    %919 = vmatprep.subr.mxu0 0.0
    %920 = vmatpush1.msra.mxu0 0.0
    %921 = vmatprep.subr.mxu0 0.0
    %922 = vmatpush1.msra.mxu0 0.0
    %923 = vmatprep.subr.mxu0 0.0
    %924 = vmatpush1.msra.mxu0 0.0
    %925 = vmatprep.subr.mxu0 0.0
    %926 = vmatpush1.msra.mxu0 0.0
    %927 = vmatprep.subr.mxu0 0.0
    %928 = vmatpush1.msra.mxu0 0.0
    %929 = vmatprep.subr.mxu0 0.0
    %930 = vmatpush1.msra.mxu0 0.0
    %931 = vmatprep.subr.mxu0 0.0
    %932 = vmatpush1.msra.mxu0 0.0
    %933 = vmatprep.subr.mxu0 0.0
    %934 = vmatpush1.msra.mxu0 0.0
    %935 = vmatprep.subr.mxu0 0.0
    %936 = vmatpush1.msra.mxu0 0.0
    %937 = vmatprep.subr.mxu0 0.0
    %938 = vmatpush1.msra.mxu0 0.0
    %939 = vmatprep.subr.mxu0 0.0
    %940 = vmatpush1.msra.mxu0 0.0
    %941 = vmatprep.subr.mxu0 0.0
    %942 = vmatpush1.msra.mxu0 0.0
    %943 = vmatprep.subr.mxu0 0.0
    %944 = vmatpush1.msra.mxu0 0.0
    %945 = vmatprep.subr.mxu0 0.0
    %946 = vmatpush1.msra.mxu0 0.0
    %947 = vmatprep.subr.mxu0 0.0
    %948 = vmatpush1.msra.mxu0 0.0
    %949 = vmatprep.subr.mxu0 0.0
    %950 = vmatpush1.msra.mxu0 0.0
    %951 = vmatprep.mubr.f32.mxu0 0.0
    %952 = vmatmul.mubr.f32.gmra.mrb[0].mxu0 %v885
    %v953 = vpop.f32.mrb[0].mxu0
    %v954 = vadd.f32 0.0, %v953
    %v955 = vpop.f32.mrb[0].mxu0
    %956 = vdwg.mxu0
    %v958 = vrot.slane %v954, 4
    %v960 = vadd.f32 %v125, %v958
    %v961 = vxor.u32 %v960, 2147483648
    %v962 = vmul.f32 %v961, 1.442695
    %v963 = vpow.pop %v962
    %v964 = vadd.f32 %v963, 1.0
    %v965 = vrcp.pop %v964
    %v966 = vmul.f32 1.0, %v965
    %v967 = vtanh.pop %v960
    %v969 = vrot.slane %v881, 4
    %970 = vrot.lane.b32.xlu0 %v969, 32
    %v971 = vpop.permute.xlu0 %970
    %v973 = vmul.f32 %v966, %v971
    %975 = vrot.lane.b32.xlu0 %v967, 64
    %v976 = vpop.permute.xlu0 %975
    %v978 = vmul.f32 %v966, %v976
    %980 = vrot.lane.b32.xlu0 %v978, 32
    %v981 = vpop.permute.xlu0 %980
    %v983 = vadd.f32 %v973, %v981
    %v984 = vtanh.pop %v983
    %986 = vrot.lane.b32.xlu0 %v984, 64
    %v987 = vpop.permute.xlu0 %986
    %v989 = vmul.f32 %v966, %v987
    %v991 = vrot.slane %v989, 4
    %992 = vrot.lane.b32.xlu0 %v991, 32
    %v993 = vpop.permute.xlu0 %992
    %v995 = vsel %vm174, %v993, %v872
    %v997 = vrot.slane %v983, 4
    %998 = vrot.lane.b32.xlu0 %v997, 96
    %v999 = vpop.permute.xlu0 %998
    %v1001 = vsel %vm174, %v999, %v881
    %v1002 = vsel %vm174, %v993, 0.0
    %1003 = vst.msk [vmem:[#allocation2 + $0xc] sm:$0x3] %vm285, %v1002
    %v1005 = vsel %vm46, %v995, 0
    %1007 = vmatprep.subr.mxu0 0.0
    %1008 = vmatpush1.msra.mxu0 %v128
    %1009 = vmatprep.subr.mxu0 0.0
    %1010 = vmatpush1.msra.mxu0 %v129
    %1011 = vmatprep.subr.mxu0 0.0
    %1012 = vmatpush1.msra.mxu0 %v130
    %1013 = vmatprep.subr.mxu0 0.0
    %1014 = vmatpush1.msra.mxu0 %v131
    %1015 = vmatprep.subr.mxu0 0.0
    %1016 = vmatpush1.msra.mxu0 0.0
    %1017 = vmatprep.subr.mxu0 0.0
    %1018 = vmatpush1.msra.mxu0 0.0
    %1019 = vmatprep.subr.mxu0 0.0
    %1020 = vmatpush1.msra.mxu0 0.0
    %1021 = vmatprep.subr.mxu0 0.0
    %1022 = vmatpush1.msra.mxu0 0.0
    %1023 = vmatprep.subr.mxu0 0.0
    %1024 = vmatpush1.msra.mxu0 0.0
    %1025 = vmatprep.subr.mxu0 0.0
    %1026 = vmatpush1.msra.mxu0 0.0
    %1027 = vmatprep.subr.mxu0 0.0
    %1028 = vmatpush1.msra.mxu0 0.0
    %1029 = vmatprep.subr.mxu0 0.0
    %1030 = vmatpush1.msra.mxu0 0.0
    %1031 = vmatprep.subr.mxu0 0.0
    %1032 = vmatpush1.msra.mxu0 0.0
    %1033 = vmatprep.subr.mxu0 0.0
    %1034 = vmatpush1.msra.mxu0 0.0
    %1035 = vmatprep.subr.mxu0 0.0
    %1036 = vmatpush1.msra.mxu0 0.0
    %1037 = vmatprep.subr.mxu0 0.0
    %1038 = vmatpush1.msra.mxu0 0.0
    %1039 = vmatprep.subr.mxu0 0.0
    %1040 = vmatpush1.msra.mxu0 0.0
    %1041 = vmatprep.subr.mxu0 0.0
    %1042 = vmatpush1.msra.mxu0 0.0
    %1043 = vmatprep.subr.mxu0 0.0
    %1044 = vmatpush1.msra.mxu0 0.0
    %1045 = vmatprep.subr.mxu0 0.0
    %1046 = vmatpush1.msra.mxu0 0.0
    %1047 = vmatprep.subr.mxu0 0.0
    %1048 = vmatpush1.msra.mxu0 0.0
    %1049 = vmatprep.subr.mxu0 0.0
    %1050 = vmatpush1.msra.mxu0 0.0
    %1051 = vmatprep.subr.mxu0 0.0
    %1052 = vmatpush1.msra.mxu0 0.0
    %1053 = vmatprep.subr.mxu0 0.0
    %1054 = vmatpush1.msra.mxu0 0.0
    %1055 = vmatprep.subr.mxu0 0.0
    %1056 = vmatpush1.msra.mxu0 0.0
    %1057 = vmatprep.subr.mxu0 0.0
    %1058 = vmatpush1.msra.mxu0 0.0
    %1059 = vmatprep.subr.mxu0 0.0
    %1060 = vmatpush1.msra.mxu0 0.0
    %1061 = vmatprep.subr.mxu0 0.0
    %1062 = vmatpush1.msra.mxu0 0.0
    %1063 = vmatprep.subr.mxu0 0.0
    %1064 = vmatpush1.msra.mxu0 0.0
    %1065 = vmatprep.subr.mxu0 0.0
    %1066 = vmatpush1.msra.mxu0 0.0
    %1067 = vmatprep.subr.mxu0 0.0
    %1068 = vmatpush1.msra.mxu0 0.0
    %1069 = vmatprep.subr.mxu0 0.0
    %1070 = vmatpush1.msra.mxu0 0.0
    %1071 = vmatprep.mubr.f32.mxu0 0.0
    %1072 = vmatmul.mubr.f32.gmra.mrb[0].mxu0 %v1005
    %v1073 = vpop.f32.mrb[0].mxu0
    %v1074 = vadd.f32 0.0, %v1073
    %v1075 = vpop.f32.mrb[0].mxu0
    %1076 = vdwg.mxu0
    %v1078 = vrot.slane %v1074, 2
    %v1080 = vadd.f32 %v125, %v1078
    %v1081 = vxor.u32 %v1080, 2147483648
    %v1082 = vmul.f32 %v1081, 1.442695
    %v1083 = vpow.pop %v1082
    %v1084 = vadd.f32 %v1083, 1.0
    %v1085 = vrcp.pop %v1084
    %v1086 = vmul.f32 1.0, %v1085
    %v1087 = vtanh.pop %v1080
    %v1089 = vrot.slane %v1001, 2
    %1090 = vrot.lane.b32.xlu0 %v1089, 32
    %v1091 = vpop.permute.xlu0 %1090
    %v1093 = vmul.f32 %v1086, %v1091
    %1095 = vrot.lane.b32.xlu0 %v1087, 64
    %v1096 = vpop.permute.xlu0 %1095
    %v1098 = vmul.f32 %v1086, %v1096
    %1100 = vrot.lane.b32.xlu0 %v1098, 32
    %v1101 = vpop.permute.xlu0 %1100
    %v1103 = vadd.f32 %v1093, %v1101
    %v1104 = vtanh.pop %v1103
    %1106 = vrot.lane.b32.xlu0 %v1104, 64
    %v1107 = vpop.permute.xlu0 %1106
    %v1109 = vmul.f32 %v1086, %v1107
    %v1111 = vrot.slane %v1109, 6
    %1112 = vrot.lane.b32.xlu0 %v1111, 32
    %v1113 = vpop.permute.xlu0 %1112
    %v1115 = vsel %vm180, %v1113, %v995
    %v1117 = vrot.slane %v1103, 6
    %1118 = vrot.lane.b32.xlu0 %v1117, 96
    %v1119 = vpop.permute.xlu0 %1118
    %v1121 = vsel %vm180, %v1119, %v1001
    %v1122 = vsel %vm180, %v1113, 0.0
    %1123 = vst.msk [vmem:[#allocation2 + $0xe] sm:$0x3] %vm285, %v1122
    %1124 = vst.msk [vmem:[#allocation5] sm:$0x3] %vm285, %v1115
    %1125 = vst.msk [vmem:[#allocation7] sm:$0x3] %vm285, %v1121
    %v1126 = vld [vmem:[#allocation2] sm:$0xff]
    %v1127 = vld [vmem:[#allocation2 + $0x8] sm:$0xff]
    %v1128 = vld [vmem:[%s5] sm:$0xff]
    %v1129 = vld [vmem:[%s5 + $0x8] sm:$0xff]
    %v1130 = vld [vmem:[%s5 + $0x10] sm:$0xff]
    %v1131 = vld [vmem:[%s5 + $0x18] sm:$0xff]
    %v1132 = vld [vmem:[%s6] sm:$0x1]
    %v1134 = vlaneseq
    %v1135 = vshrl.u32 %v1134, 7
    %v1136 = vsub.s32 0, %v1135
    %v1137 = vrot.slane %v1132, %v1136
    %v1140 = vsel %vm46, %v1126, 0
    %v1143 = vsel %vm46, %v1127, 0
    %1145 = vmatprep.subr.mxu0 0.0
    %1146 = vmatpush1.msra.mxu0 %v1128
    %1147 = vmatprep.subr.mxu0 0.0
    %1148 = vmatpush1.msra.mxu0 %v1129
    %1149 = vmatprep.subr.mxu0 0.0
    %1150 = vmatpush1.msra.mxu0 %v1130
    %1151 = vmatprep.subr.mxu0 0.0
    %1152 = vmatpush1.msra.mxu0 %v1131
    %1153 = vmatprep.subr.mxu0 0.0
    %1154 = vmatpush1.msra.mxu0 0.0
    %1155 = vmatprep.subr.mxu0 0.0
    %1156 = vmatpush1.msra.mxu0 0.0
    %1157 = vmatprep.subr.mxu0 0.0
    %1158 = vmatpush1.msra.mxu0 0.0
    %1159 = vmatprep.subr.mxu0 0.0
    %1160 = vmatpush1.msra.mxu0 0.0
    %1161 = vmatprep.subr.mxu0 0.0
    %1162 = vmatpush1.msra.mxu0 0.0
    %1163 = vmatprep.subr.mxu0 0.0
    %1164 = vmatpush1.msra.mxu0 0.0
    %1165 = vmatprep.subr.mxu0 0.0
    %1166 = vmatpush1.msra.mxu0 0.0
    %1167 = vmatprep.subr.mxu0 0.0
    %1168 = vmatpush1.msra.mxu0 0.0
    %1169 = vmatprep.subr.mxu0 0.0
    %1170 = vmatpush1.msra.mxu0 0.0
    %1171 = vmatprep.subr.mxu0 0.0
    %1172 = vmatpush1.msra.mxu0 0.0
    %1173 = vmatprep.subr.mxu0 0.0
    %1174 = vmatpush1.msra.mxu0 0.0
    %1175 = vmatprep.subr.mxu0 0.0
    %1176 = vmatpush1.msra.mxu0 0.0
    %1177 = vmatprep.subr.mxu0 0.0
    %1178 = vmatpush1.msra.mxu0 0.0
    %1179 = vmatprep.subr.mxu0 0.0
    %1180 = vmatpush1.msra.mxu0 0.0
    %1181 = vmatprep.subr.mxu0 0.0
    %1182 = vmatpush1.msra.mxu0 0.0
    %1183 = vmatprep.subr.mxu0 0.0
    %1184 = vmatpush1.msra.mxu0 0.0
    %1185 = vmatprep.subr.mxu0 0.0
    %1186 = vmatpush1.msra.mxu0 0.0
    %1187 = vmatprep.subr.mxu0 0.0
    %1188 = vmatpush1.msra.mxu0 0.0
    %1189 = vmatprep.subr.mxu0 0.0
    %1190 = vmatpush1.msra.mxu0 0.0
    %1191 = vmatprep.subr.mxu0 0.0
    %1192 = vmatpush1.msra.mxu0 0.0
    %1193 = vmatprep.subr.mxu0 0.0
    %1194 = vmatpush1.msra.mxu0 0.0
    %1195 = vmatprep.subr.mxu0 0.0
    %1196 = vmatpush1.msra.mxu0 0.0
    %1197 = vmatprep.subr.mxu0 0.0
    %1198 = vmatpush1.msra.mxu0 0.0
    %1199 = vmatprep.subr.mxu0 0.0
    %1200 = vmatpush1.msra.mxu0 0.0
    %1201 = vmatprep.subr.mxu0 0.0
    %1202 = vmatpush1.msra.mxu0 0.0
    %1203 = vmatprep.subr.mxu0 0.0
    %1204 = vmatpush1.msra.mxu0 0.0
    %1205 = vmatprep.subr.mxu0 0.0
    %1206 = vmatpush1.msra.mxu0 0.0
    %1207 = vmatprep.subr.mxu0 0.0
    %1208 = vmatpush1.msra.mxu0 0.0
    %1209 = vmatprep.mubr.f32.mxu0 0.0
    %1210 = vmatmul.mubr.f32.gmra.mrb[0].mxu0 %v1140
    %v1211 = vpop.f32.mrb[0].mxu0
    %v1212 = vadd.f32 %v1137, %v1211
    %v1213 = vpop.f32.mrb[0].mxu0
    %1214 = vmatprep.mubr.f32.mxu0 0.0
    %1215 = vmatmul.mubr.f32.gmra.mrb[0].mxu0 %v1143
    %v1216 = vpop.f32.mrb[0].mxu0
    %v1217 = vadd.f32 %v1137, %v1216
    %v1218 = vpop.f32.mrb[0].mxu0
    %1219 = vdwg.mxu0
    %vm1220 = vcmask 123904
    %v1221 = vsel %vm1220, %v1212, -inf
    %v1222 = vrot.slane %v1221, 4
    %v1223 = vmax.f32 %v1221, %v1222
    %v1224 = vrot.slane %v1223, 2
    %v1225 = vmax.f32 %v1223, %v1224
    %v1226 = vrot.slane %v1225, 1
    %v1227 = vmax.f32 %v1225, %v1226
    %v1228 = vsub.f32 %v1212, %v1227
    %v1229 = vmul.f32 %v1228, 1.442695
    %v1230 = vpow.pop %v1229
    %v1231 = vsel %vm1220, %v1230, 0.0
    %v1232 = vrot.slane %v1231, 4
    %v1233 = vadd.f32 %v1231, %v1232
    %v1234 = vrot.slane %v1233, 2
    %v1235 = vadd.f32 %v1233, %v1234
    %v1236 = vrot.slane %v1235, 1
    %v1237 = vadd.f32 %v1235, %v1236
    %v1238 = vlog2.pop %v1237
    %v1239 = vmul.f32 %v1238, 0.6931472
    %v1240 = vsub.f32 %v1228, %v1239
    %1241 = vst.msk [vmem:[#allocation3] sm:$0x3] %vm1220, %v1240
    %vm1242 = vcmask 125954
    %v1243 = vsel %vm1242, %v1212, -inf
    %v1244 = vrot.slane %v1243, 4
    %v1245 = vmax.f32 %v1243, %v1244
    %v1246 = vrot.slane %v1245, 2
    %v1247 = vmax.f32 %v1245, %v1246
    %v1248 = vrot.slane %v1247, 1
    %v1249 = vmax.f32 %v1247, %v1248
    %v1250 = vsub.f32 %v1212, %v1249
    %v1251 = vmul.f32 %v1250, 1.442695
    %v1252 = vpow.pop %v1251
    %v1254 = vrot.slane %v1252, 2
    %v1256 = vsel %vm1220, %v1254, 0.0
    %v1257 = vrot.slane %v1256, 4
    %v1258 = vadd.f32 %v1256, %v1257
    %v1259 = vrot.slane %v1258, 2
    %v1260 = vadd.f32 %v1258, %v1259
    %v1261 = vrot.slane %v1260, 1
    %v1262 = vadd.f32 %v1260, %v1261
    %v1263 = vlog2.pop %v1262
    %v1264 = vmul.f32 %v1263, 0.6931472
    %v1265 = vsub.f32 %v1250, %v1264
    %1266 = vst.msk [vmem:[#allocation3] sm:$0xc] %vm1242, %v1265
    %vm1267 = vcmask 128004
    %v1268 = vsel %vm1267, %v1212, -inf
    %v1269 = vrot.slane %v1268, 4
    %v1270 = vmax.f32 %v1268, %v1269
    %v1271 = vrot.slane %v1270, 2
    %v1272 = vmax.f32 %v1270, %v1271
    %v1273 = vrot.slane %v1272, 1
    %v1274 = vmax.f32 %v1272, %v1273
    %v1275 = vsub.f32 %v1212, %v1274
    %v1276 = vmul.f32 %v1275, 1.442695
    %v1277 = vpow.pop %v1276
    %v1279 = vrot.slane %v1277, 4
    %v1281 = vsel %vm1220, %v1279, 0.0
    %v1282 = vrot.slane %v1281, 4
    %v1283 = vadd.f32 %v1281, %v1282
    %v1284 = vrot.slane %v1283, 2
    %v1285 = vadd.f32 %v1283, %v1284
    %v1286 = vrot.slane %v1285, 1
    %v1287 = vadd.f32 %v1285, %v1286
    %v1288 = vlog2.pop %v1287
    %v1289 = vmul.f32 %v1288, 0.6931472
    %v1290 = vsub.f32 %v1275, %v1289
    %1291 = vst.msk [vmem:[#allocation3] sm:$0x30] %vm1267, %v1290
    %vm1292 = vcmask 130054
    %v1293 = vsel %vm1292, %v1212, -inf
    %v1294 = vrot.slane %v1293, 4
    %v1295 = vmax.f32 %v1293, %v1294
    %v1296 = vrot.slane %v1295, 2
    %v1297 = vmax.f32 %v1295, %v1296
    %v1298 = vrot.slane %v1297, 1
    %v1299 = vmax.f32 %v1297, %v1298
    %v1300 = vsub.f32 %v1212, %v1299
    %v1301 = vmul.f32 %v1300, 1.442695
    %v1302 = vpow.pop %v1301
    %v1304 = vrot.slane %v1302, 6
    %v1306 = vsel %vm1220, %v1304, 0.0
    %v1307 = vrot.slane %v1306, 4
    %v1308 = vadd.f32 %v1306, %v1307
    %v1309 = vrot.slane %v1308, 2
    %v1310 = vadd.f32 %v1308, %v1309
    %v1311 = vrot.slane %v1310, 1
    %v1312 = vadd.f32 %v1310, %v1311
    %v1313 = vlog2.pop %v1312
    %v1314 = vmul.f32 %v1313, 0.6931472
    %v1315 = vsub.f32 %v1300, %v1314
    %1316 = vst.msk [vmem:[#allocation3] sm:$0xc0] %vm1292, %v1315
    %v1317 = vsel %vm1220, %v1217, -inf
    %v1318 = vrot.slane %v1317, 4
    %v1319 = vmax.f32 %v1317, %v1318
    %v1320 = vrot.slane %v1319, 2
    %v1321 = vmax.f32 %v1319, %v1320
    %v1322 = vrot.slane %v1321, 1
    %v1323 = vmax.f32 %v1321, %v1322
    %v1324 = vsub.f32 %v1217, %v1323
    %v1325 = vmul.f32 %v1324, 1.442695
    %v1326 = vpow.pop %v1325
    %v1327 = vsel %vm1220, %v1326, 0.0
    %v1328 = vrot.slane %v1327, 4
    %v1329 = vadd.f32 %v1327, %v1328
    %v1330 = vrot.slane %v1329, 2
    %v1331 = vadd.f32 %v1329, %v1330
    %v1332 = vrot.slane %v1331, 1
    %v1333 = vadd.f32 %v1331, %v1332
    %v1334 = vlog2.pop %v1333
    %v1335 = vmul.f32 %v1334, 0.6931472
    %v1336 = vsub.f32 %v1324, %v1335
    %1337 = vst.msk [vmem:[#allocation3 + $0x8] sm:$0x3] %vm1220, %v1336
    %v1338 = vsel %vm1242, %v1217, -inf
    %v1339 = vrot.slane %v1338, 4
    %v1340 = vmax.f32 %v1338, %v1339
    %v1341 = vrot.slane %v1340, 2
    %v1342 = vmax.f32 %v1340, %v1341
    %v1343 = vrot.slane %v1342, 1
    %v1344 = vmax.f32 %v1342, %v1343
    %v1345 = vsub.f32 %v1217, %v1344
    %v1346 = vmul.f32 %v1345, 1.442695
    %v1347 = vpow.pop %v1346
    %v1349 = vrot.slane %v1347, 2
    %v1351 = vsel %vm1220, %v1349, 0.0
    %v1352 = vrot.slane %v1351, 4
    %v1353 = vadd.f32 %v1351, %v1352
    %v1354 = vrot.slane %v1353, 2
    %v1355 = vadd.f32 %v1353, %v1354
    %v1356 = vrot.slane %v1355, 1
    %v1357 = vadd.f32 %v1355, %v1356
    %v1358 = vlog2.pop %v1357
    %v1359 = vmul.f32 %v1358, 0.6931472
    %v1360 = vsub.f32 %v1345, %v1359
    %1361 = vst.msk [vmem:[#allocation3 + $0x8] sm:$0xc] %vm1242, %v1360
    %v1362 = vsel %vm1267, %v1217, -inf
    %v1363 = vrot.slane %v1362, 4
    %v1364 = vmax.f32 %v1362, %v1363
    %v1365 = vrot.slane %v1364, 2
    %v1366 = vmax.f32 %v1364, %v1365
    %v1367 = vrot.slane %v1366, 1
    %v1368 = vmax.f32 %v1366, %v1367
    %v1369 = vsub.f32 %v1217, %v1368
    %v1370 = vmul.f32 %v1369, 1.442695
    %v1371 = vpow.pop %v1370
    %v1373 = vrot.slane %v1371, 4
    %v1375 = vsel %vm1220, %v1373, 0.0
    %v1376 = vrot.slane %v1375, 4
    %v1377 = vadd.f32 %v1375, %v1376
    %v1378 = vrot.slane %v1377, 2
    %v1379 = vadd.f32 %v1377, %v1378
    %v1380 = vrot.slane %v1379, 1
    %v1381 = vadd.f32 %v1379, %v1380
    %v1382 = vlog2.pop %v1381
    %v1383 = vmul.f32 %v1382, 0.6931472
    %v1384 = vsub.f32 %v1369, %v1383
    %1385 = vst.msk [vmem:[#allocation3 + $0x8] sm:$0x30] %vm1267, %v1384
    %v1386 = vsel %vm1292, %v1217, -inf
    %v1387 = vrot.slane %v1386, 4
    %v1388 = vmax.f32 %v1386, %v1387
    %v1389 = vrot.slane %v1388, 2
    %v1390 = vmax.f32 %v1388, %v1389
    %v1391 = vrot.slane %v1390, 1
    %v1392 = vmax.f32 %v1390, %v1391
    %v1393 = vsub.f32 %v1217, %v1392
    %v1394 = vmul.f32 %v1393, 1.442695
    %v1395 = vpow.pop %v1394
    %v1397 = vrot.slane %v1395, 6
    %v1399 = vsel %vm1220, %v1397, 0.0
    %v1400 = vrot.slane %v1399, 4
    %v1401 = vadd.f32 %v1399, %v1400
    %v1402 = vrot.slane %v1401, 2
    %v1403 = vadd.f32 %v1401, %v1402
    %v1404 = vrot.slane %v1403, 1
    %v1405 = vadd.f32 %v1403, %v1404
    %v1406 = vlog2.pop %v1405
    %v1407 = vmul.f32 %v1406, 0.6931472
    %v1408 = vsub.f32 %v1393, %v1407
    %1409 = vst.msk [vmem:[#allocation3 + $0x8] sm:$0xc0] %vm1292, %v1408
    // Predicated region
    $region30: #{decoder_rnn_forward.1} parent=1 // pred_check
      _
    $region31: #{decoder_rnn_forward.1} parent=1 // pred_check_branch
      %1411 = sbr.rel (0) target = $region33
    $region32: #{decoder_rnn_forward.1} parent=1 // pred_region
      %s1413 = ssub.s32 256, 256
      %1414 = vsyncadd [#allocation4], %s1413
      %s1415 = sshll.u32 [#allocation3], 4
      %s1416 = int_to_ptr.vmem [resolvable:$true] %s1415
      %1421 = dma.vmem_to_hbm [thread:$0]  %s1416, 256, %s7, [#allocation4], 128, 128, 8
    $region33: #{decoder_rnn_forward.1} parent=1 // pred_fallthru
      _
    // Predicated region
    $region34: #{decoder_rnn_forward.1} parent=1 // pred_check
      _
    $region35: #{decoder_rnn_forward.1} parent=1 // pred_check_branch
      %1423 = sbr.rel (0) target = $region37
    $region36: #{decoder_rnn_forward.1} parent=1 // pred_region
      %s1425 = ssub.s32 32, 32
      %1426 = vsyncadd [#allocation6], %s1425
      %s1428 = sshll.u32 [#allocation5], 4
      %s1429 = int_to_ptr.vmem [resolvable:$true] %s1428
      %1431 = dma.vmem_to_hbm [thread:$0]  %s1429, 32, %s8, [#allocation6]
    $region37: #{decoder_rnn_forward.1} parent=1 // pred_fallthru
      _
    // Predicated region
    $region38: #{decoder_rnn_forward.1} parent=1 // pred_check
      _
    $region39: #{decoder_rnn_forward.1} parent=1 // pred_check_branch
      %1433 = sbr.rel (0) target = $region41
    $region40: #{decoder_rnn_forward.1} parent=1 // pred_region
      %s1435 = ssub.s32 32, 32
      %1436 = vsyncadd [#allocation6], %s1435
      %s1438 = sshll.u32 [#allocation7], 4
      %s1439 = int_to_ptr.vmem [resolvable:$true] %s1438
      %1441 = dma.vmem_to_hbm [thread:$0]  %s1439, 32, %s9, [#allocation6]
    $region41: #{decoder_rnn_forward.1} parent=1 // pred_fallthru
      _
    // Predicated region
    $region42: #{decoder_rnn_forward.1} parent=1 // pred_check
      _
    $region43: #{decoder_rnn_forward.1} parent=1 // pred_check_branch
      %1443 = sbr.rel (0) target = $region45
    $region44: #{decoder_rnn_forward.1} parent=1 // pred_region
      %1444 = dma.done [#allocation4], 256
    $region45: #{decoder_rnn_forward.1} parent=1 // pred_fallthru
      _
    // Predicated region
    $region46: #{decoder_rnn_forward.1} parent=1 // pred_check
      _
    $region47: #{decoder_rnn_forward.1} parent=1 // pred_check_branch
      %1446 = sbr.rel (0) target = $region49
    $region48: #{decoder_rnn_forward.1} parent=1 // pred_region
      %1447 = dma.done [#allocation6], 32
    $region49: #{decoder_rnn_forward.1} parent=1 // pred_fallthru
      _
    // Predicated region
    $region50: #{decoder_rnn_forward.1} parent=1 // pred_check
      _
    $region51: #{decoder_rnn_forward.1} parent=1 // pred_check_branch
      %1449 = sbr.rel (0) target = $region53
    $region52: #{decoder_rnn_forward.1} parent=1 // pred_region
      %1450 = dma.done [#allocation6], 32
    $region53: #{decoder_rnn_forward.1} parent=1 // pred_fallthru
      _
    %1451 = vsyncpa [#allocation4], 1
    %1452 = vsyncpa [#allocation6], 1

</llo_original>
